<compile_context>
chip_gen: v7x
topology: tpu7x:2x2x1
jax: 0.10.0
libtpu: 0.0.40
codegen_flags: <defaults>
</compile_context>

<pallas_src>
import jax
import jax.numpy as jnp
from jax.experimental import pallas as pl
from jax.experimental.pallas import tpu as pltpu

LANE = 128


def _round_up(x, m):
    return ((x + m - 1) // m) * m


# ---------------------------------------------------------------------------
# Kernel: one batch tile -> log-probs over the (lane-padded) vocab.
# ---------------------------------------------------------------------------
def ngram_mlp_kernel(ids_ref, w1f_ref, b1_ref, w2_ref, b2_ref, out_ref):
    tb = out_ref.shape[0]             # batch tile
    kdim = w1f_ref.shape[0]           # C * Vp (stacked fused-table rows)
    c_ctx = ids_ref.shape[1]          # context size (static, small)
    v_pad = kdim // c_ctx             # vocab padded to lane multiple
    # h_dim = w1f_ref.shape[1]        # hidden (=128)

    ids = ids_ref[...]                                                # (TB, C) int32
    lane_iota = jax.lax.broadcasted_iota(jnp.int32, (tb, kdim), 1)    # (TB, C*Vp)

    # Stacked one-hot: for context position c the hot lane is c*Vp + ids[:, c].
    # Distinct positions hit disjoint lane ranges, so OR-ing is exact.
    match = lane_iota == ids[:, 0:1]
    for c in range(1, c_ctx):         # static unroll, C is tiny
        match = match | (lane_iota == (ids[:, c:c + 1] + c * v_pad))
    one_hot = match.astype(jnp.bfloat16)                              # single cast

    # Fused gather + linear1: one K=C*Vp, N=H MXU contraction, f32 accumulate.
    acc = jnp.dot(one_hot, w1f_ref[...],
                  preferred_element_type=jnp.float32)                 # (TB, H) f32

    h = jnp.maximum(acc + b1_ref[...], 0.0)                           # f32 ReLU
    h = h.astype(jnp.bfloat16)                                        # bf16 MXU input

    # linear2 (lane-dense padded vocab); padded lanes carry a -1e30 bias.
    logits = jnp.dot(h, w2_ref[...],
                     preferred_element_type=jnp.float32) + b2_ref[...]  # (TB, Vp) f32

    # log_softmax in f32 (padded lanes -> exp()==0, so the normalizer is exact).
    m = jnp.max(logits, axis=1, keepdims=True)
    shifted = logits - m
    lse = jnp.log(jnp.sum(jnp.exp(shifted), axis=1, keepdims=True))
    out_ref[...] = (shifted - lse).astype(out_ref.dtype)


# ---------------------------------------------------------------------------
# One-time parameter preparation (hoisted out of the per-call path).
# ---------------------------------------------------------------------------
def prepare_ngram_params(emb_table, w1, b1, w2, b2):
    """emb_table: (V, E); w1: (C*E, H); b1: (H,); w2: (H, V); b2: (V,).

    Weights are stored as (in, out), i.e. transposed PyTorch layout.
    Returns padded / fused bf16 operands ready for ngram_forward.
    """
    V, E = emb_table.shape
    CE, H = w1.shape
    C = CE // E
    v_pad = _round_up(V, LANE)

    emb_b = emb_table.astype(jnp.bfloat16)
    w1_b = w1.astype(jnp.bfloat16)

    # Fused table: W1f[c, v, h] = sum_e emb_b[v, e] * w1_b[c*E + e, h]
    # (f32 product of the bf16-cast operands, rounded to bf16 exactly once).
    w1_by_c = w1_b.reshape(C, E, H)
    w1f = jnp.einsum('ve,ceh->cvh',
                     emb_b.astype(jnp.float32),
                     w1_by_c.astype(jnp.float32)).astype(jnp.bfloat16)   # (C, V, H)
    w1f_p = jnp.zeros((C, v_pad, H), jnp.bfloat16).at[:, :V, :].set(w1f)
    w1f_p = w1f_p.reshape(C * v_pad, H)                                  # (C*Vp, H)

    b1_2 = b1.reshape(1, H).astype(jnp.float32)
    w2_p = jnp.zeros((H, v_pad), jnp.bfloat16).at[:, :V].set(w2.astype(jnp.bfloat16))
    # Padded logit lanes get a huge negative bias -> exp()==0 in log_softmax.
    b2_p = jnp.full((1, v_pad), -1e30, jnp.float32).at[0, :V].set(b2.astype(jnp.float32))

    return dict(w1f=w1f_p, b1=b1_2, w2=w2_p, b2=b2_p,
                vocab=V, v_pad=v_pad, context=C, hidden=H)


def _choose_batch_tile(B, block_b):
    tb = min(block_b, _round_up(B, 8))
    # Keep >= 2 grid steps when the batch allows, so the "parallel" axis can
    # shard across v7x's two TensorCores (irrelevant on v5e/v6e, harmless).
    if B > 8 and pl.cdiv(B, tb) < 2:
        tb = max(8, _round_up(pl.cdiv(B, 2), 8))
    return tb


# ---------------------------------------------------------------------------
# Forward wrapper: pads the batch, launches the kernel, slices back.
# ---------------------------------------------------------------------------
def ngram_forward(inputs, params, *, block_b=512):
    """inputs: (B, C) int32 token ids in [0, vocab)."""
    B, C = inputs.shape
    assert C == params["context"]
    V, v_pad, H = params["vocab"], params["v_pad"], params["hidden"]
    w1f, b1, w2, b2 = params["w1f"], params["b1"], params["w2"], params["b2"]

    tb = _choose_batch_tile(B, block_b)
    b_pad = _round_up(B, tb)
    ids = inputs.astype(jnp.int32)
    if b_pad != B:
        ids = jnp.zeros((b_pad, C), jnp.int32).at[:B, :].set(ids)
    nb = b_pad // tb

    # NOTE: at large vocab, add a vocab grid axis (online log_softmax) and
    # single-buffer the constant weight operands to stay inside v7x's 64 MiB
    # VMEM; at V=32 everything is tiny and resident, so plain specs suffice.
    out = pl.pallas_call(
        ngram_mlp_kernel,
        out_shape=jax.ShapeDtypeStruct((b_pad, v_pad), jnp.float32),
        grid=(nb,),
        in_specs=[
            pl.BlockSpec((tb, C), lambda i: (i, 0)),            # token ids (batch-tiled)
            pl.BlockSpec((C * v_pad, H), lambda i: (0, 0)),     # fused emb@w1 table
            pl.BlockSpec((1, H), lambda i: (0, 0)),             # b1
            pl.BlockSpec((H, v_pad), lambda i: (0, 0)),         # w2 (vocab-padded)
            pl.BlockSpec((1, v_pad), lambda i: (0, 0)),         # b2 (-1e30 padded lanes)
        ],
        out_specs=pl.BlockSpec((tb, v_pad), lambda i: (i, 0)),
        compiler_params=pltpu.CompilerParams(
            dimension_semantics=("parallel",)),
    )(ids, w1f, b1, w2, b2)

    return out[:B, :V]


# ---------------------------------------------------------------------------
# Pure-JAX reference mirroring the PyTorch forward (same bf16 weight cast).
# ---------------------------------------------------------------------------
def reference_forward(inputs, emb_table, w1, b1, w2, b2):
    B, C = inputs.shape
    E = emb_table.shape[1]
    emb_b = emb_table.astype(jnp.bfloat16).astype(jnp.float32)
    w1_b = w1.astype(jnp.bfloat16).astype(jnp.float32)
    w2_b = w2.astype(jnp.bfloat16).astype(jnp.float32)
    embeds = jnp.take(emb_b, inputs, axis=0).reshape(B, C * E)
    h = jnp.maximum(embeds @ w1_b + b1, 0.0)
    h = h.astype(jnp.bfloat16).astype(jnp.float32)
    logits = h @ w2_b + b2
    return jax.nn.log_softmax(logits, axis=1)


if __name__ == "__main__":
    # Small shapes consistent with the module (hidden fixed at 128 by linear1).
    vocab_size = 32
    embedding_dim = 16
    context_size = 4
    hidden = 128
    batch = 200            # not a tile multiple -> exercises batch padding path

    key = jax.random.PRNGKey(0)
    k_emb, k_w1, k_b1, k_w2, k_b2, k_in = jax.random.split(key, 6)

    # Deterministic synthetic parameters (weights stored as (in, out) == torch W.T).
    emb_table = jax.random.normal(k_emb, (vocab_size, embedding_dim), jnp.float32)
    w1 = jax.random.normal(k_w1, (context_size * embedding_dim, hidden), jnp.float32) * 0.1
    b1 = jax.random.normal(k_b1, (hidden,), jnp.float32) * 0.1
    w2 = jax.random.normal(k_w2, (hidden, vocab_size), jnp.float32) * 0.1
    b2 = jax.random.normal(k_b2, (vocab_size,), jnp.float32) * 0.1

    # Token ids must lie in [0, vocab); out-of-range ids would silently select
    # a zero row of the fused table.
    inputs = jax.random.randint(k_in, (batch, context_size), 0, vocab_size, jnp.int32)

    params = prepare_ngram_params(emb_table, w1, b1, w2, b2)   # one-time prep
    log_probs = ngram_forward(inputs, params)
    jax.block_until_ready(log_probs)

    ref = reference_forward(inputs, emb_table, w1, b1, w2, b2)
    assert log_probs.shape == (batch, vocab_size)
    max_err = float(jnp.max(jnp.abs(log_probs - ref)))
    # Fused bf16 emb@w1 table adds one extra bf16 rounding vs. the reference,
    # so allow a slightly looser (still bug-detecting) tolerance.
    assert jnp.allclose(log_probs, ref, atol=1e-2, rtol=1e-2), max_err
    # rows of exp(log_probs) must sum to 1 (checks the padded-lane masking)
    row_sums = jnp.sum(jnp.exp(log_probs), axis=1)
    assert jnp.allclose(row_sums, 1.0, atol=1e-3), float(jnp.max(jnp.abs(row_sums - 1.0)))

    print("KERNEL_OK")
</pallas_src>

<mosaic_0001>
module attributes {stable_mosaic.version = 11 : i64} {
  func.func @ngram_mlp_kernel(%arg0: i32, %arg1: memref<104x4xi32, #tpu.memory_space<vmem>>, %arg2: memref<512x128xbf16, #tpu.memory_space<vmem>>, %arg3: memref<1x128xf32, #tpu.memory_space<vmem>>, %arg4: memref<128x128xbf16, #tpu.memory_space<vmem>>, %arg5: memref<1x128xf32, #tpu.memory_space<vmem>>, %arg6: memref<104x128xf32, #tpu.memory_space<vmem>>) attributes {dimension_semantics = [#tpu.dimension_semantics<parallel>], iteration_bounds = array<i64: 2>, scalar_prefetch = 0 : i64, scratch_operands = 0 : i64, tpu.core_type = #tpu.core_type<tc>, window_params = [{transform_indices = @transform_0, window_bounds = array<i64: 104, 4>}, {pipeline_mode = #tpu.pipeline_mode<synchronous>, transform_indices = @transform_1, window_bounds = array<i64: 512, 128>}, {pipeline_mode = #tpu.pipeline_mode<synchronous>, transform_indices = @transform_2, window_bounds = array<i64: 1, 128>}, {pipeline_mode = #tpu.pipeline_mode<synchronous>, transform_indices = @transform_3, window_bounds = array<i64: 128, 128>}, {pipeline_mode = #tpu.pipeline_mode<synchronous>, transform_indices = @transform_4, window_bounds = array<i64: 1, 128>}, {transform_indices = @transform_5, window_bounds = array<i64: 104, 128>}]} {
    %c0 = arith.constant 0 : index
    %c0_0 = arith.constant 0 : index
    %0 = vector.load %arg1[%c0, %c0_0] : memref<104x4xi32, #tpu.memory_space<vmem>>, vector<104x4xi32>
    %1 = tpu.iota {dimensions = array<i32: 1>} : vector<104x512xi32>
    %2 = vector.extract_strided_slice %0 {offsets = [0, 0], sizes = [104, 1], strides = [1, 1]} : vector<104x4xi32> to vector<104x1xi32>
    %3 = vector.broadcast %2 : vector<104x1xi32> to vector<104x512xi32>
    %4 = arith.cmpi eq, %1, %3 : vector<104x512xi32>
    %5 = vector.extract_strided_slice %0 {offsets = [0, 1], sizes = [104, 1], strides = [1, 1]} : vector<104x4xi32> to vector<104x1xi32>
    %c128_i32 = arith.constant 128 : i32
    %6 = vector.broadcast %c128_i32 : i32 to vector<104x1xi32>
    %7 = arith.addi %5, %6 : vector<104x1xi32>
    %8 = vector.broadcast %7 : vector<104x1xi32> to vector<104x512xi32>
    %9 = arith.cmpi eq, %1, %8 : vector<104x512xi32>
    %10 = arith.ori %4, %9 : vector<104x512xi1>
    %11 = vector.extract_strided_slice %0 {offsets = [0, 2], sizes = [104, 1], strides = [1, 1]} : vector<104x4xi32> to vector<104x1xi32>
    %c256_i32 = arith.constant 256 : i32
    %12 = vector.broadcast %c256_i32 : i32 to vector<104x1xi32>
    %13 = arith.addi %11, %12 : vector<104x1xi32>
    %14 = vector.broadcast %13 : vector<104x1xi32> to vector<104x512xi32>
    %15 = arith.cmpi eq, %1, %14 : vector<104x512xi32>
    %16 = arith.ori %10, %15 : vector<104x512xi1>
    %17 = vector.extract_strided_slice %0 {offsets = [0, 3], sizes = [104, 1], strides = [1, 1]} : vector<104x4xi32> to vector<104x1xi32>
    %c384_i32 = arith.constant 384 : i32
    %18 = vector.broadcast %c384_i32 : i32 to vector<104x1xi32>
    %19 = arith.addi %17, %18 : vector<104x1xi32>
    %20 = vector.broadcast %19 : vector<104x1xi32> to vector<104x512xi32>
    %21 = arith.cmpi eq, %1, %20 : vector<104x512xi32>
    %22 = arith.ori %16, %21 : vector<104x512xi1>
    %23 = arith.extui %22 : vector<104x512xi1> to vector<104x512xi32>
    %24 = arith.sitofp %23 : vector<104x512xi32> to vector<104x512xf32>
    %25 = arith.truncf %24 : vector<104x512xf32> to vector<104x512xbf16>
    %c0_1 = arith.constant 0 : index
    %c0_2 = arith.constant 0 : index
    %26 = vector.load %arg2[%c0_1, %c0_2] : memref<512x128xbf16, #tpu.memory_space<vmem>>, vector<512x128xbf16>
    %cst = arith.constant dense<0.000000e+00> : vector<104x128xf32>
    %27 = tpu.matmul %25, %26, %cst {dimension_numbers = #tpu.dot_dimension_numbers<[1], [0], [0], [1], [0, 0, 1, 1], [], []>} : vector<104x512xbf16>, vector<512x128xbf16>, vector<104x128xf32> -> vector<104x128xf32>
    %c0_3 = arith.constant 0 : index
    %c0_4 = arith.constant 0 : index
    %28 = vector.load %arg3[%c0_3, %c0_4] : memref<1x128xf32, #tpu.memory_space<vmem>>, vector<1x128xf32>
    %29 = vector.broadcast %28 : vector<1x128xf32> to vector<104x128xf32>
    %30 = arith.addf %27, %29 : vector<104x128xf32>
    %cst_5 = arith.constant 0.000000e+00 : f32
    %31 = vector.broadcast %cst_5 : f32 to vector<104x128xf32>
    %32 = arith.maximumf %30, %31 : vector<104x128xf32>
    %33 = arith.truncf %32 : vector<104x128xf32> to vector<104x128xbf16>
    %c0_6 = arith.constant 0 : index
    %c0_7 = arith.constant 0 : index
    %34 = vector.load %arg4[%c0_6, %c0_7] : memref<128x128xbf16, #tpu.memory_space<vmem>>, vector<128x128xbf16>
    %cst_8 = arith.constant dense<0.000000e+00> : vector<104x128xf32>
    %35 = tpu.matmul %33, %34, %cst_8 {dimension_numbers = #tpu.dot_dimension_numbers<[1], [0], [0], [1], [0, 0, 1, 1], [], []>} : vector<104x128xbf16>, vector<128x128xbf16>, vector<104x128xf32> -> vector<104x128xf32>
    %c0_9 = arith.constant 0 : index
    %c0_10 = arith.constant 0 : index
    %36 = vector.load %arg5[%c0_9, %c0_10] : memref<1x128xf32, #tpu.memory_space<vmem>>, vector<1x128xf32>
    %37 = vector.broadcast %36 : vector<1x128xf32> to vector<104x128xf32>
    %38 = arith.addf %35, %37 : vector<104x128xf32>
    %cst_11 = arith.constant dense<0xFF800000> : vector<104xf32>
    %39 = vector.multi_reduction <maximumf>, %38, %cst_11 [1] : vector<104x128xf32> to vector<104xf32>
    %40 = vector.shape_cast %39 : vector<104xf32> to vector<104x1xf32>
    %41 = vector.broadcast %40 : vector<104x1xf32> to vector<104x128xf32>
    %42 = arith.subf %38, %41 : vector<104x128xf32>
    %43 = math.exp %42 : vector<104x128xf32>
    %cst_12 = arith.constant dense<0.000000e+00> : vector<104xf32>
    %44 = vector.multi_reduction <add>, %43, %cst_12 [1] : vector<104x128xf32> to vector<104xf32>
    %45 = vector.shape_cast %44 : vector<104xf32> to vector<104x1xf32>
    %46 = math.log %45 : vector<104x1xf32>
    %47 = vector.broadcast %46 : vector<104x1xf32> to vector<104x128xf32>
    %48 = arith.subf %42, %47 : vector<104x128xf32>
    %c0_13 = arith.constant 0 : index
    %c0_14 = arith.constant 0 : index
    %49 = vector.load %arg6[%c0_13, %c0_14] : memref<104x128xf32, #tpu.memory_space<vmem>>, vector<104x128xf32>
    tpu.vector_store %arg6[%c0_13, %c0_14], %48 {strides = array<i32>} : memref<104x128xf32, #tpu.memory_space<vmem>>, vector<104x128xf32>,
    return
  }
  func.func @transform_0(%arg0: i32) -> (i32, i32) {
    %c0_i32 = arith.constant 0 : i32
    %c0_i32_0 = arith.constant 0 : i32
    return %arg0, %c0_i32 : i32, i32
  }
  func.func @transform_1(%arg0: i32) -> (i32, i32) {
    %c0_i32 = arith.constant 0 : i32
    %c0_i32_0 = arith.constant 0 : i32
    %c0_i32_1 = arith.constant 0 : i32
    return %c0_i32, %c0_i32_0 : i32, i32
  }
  func.func @transform_2(%arg0: i32) -> (i32, i32) {
    %c0_i32 = arith.constant 0 : i32
    %c0_i32_0 = arith.constant 0 : i32
    %c0_i32_1 = arith.constant 0 : i32
    return %c0_i32, %c0_i32_0 : i32, i32
  }
  func.func @transform_3(%arg0: i32) -> (i32, i32) {
    %c0_i32 = arith.constant 0 : i32
    %c0_i32_0 = arith.constant 0 : i32
    %c0_i32_1 = arith.constant 0 : i32
    return %c0_i32, %c0_i32_0 : i32, i32
  }
  func.func @transform_4(%arg0: i32) -> (i32, i32) {
    %c0_i32 = arith.constant 0 : i32
    %c0_i32_0 = arith.constant 0 : i32
    %c0_i32_1 = arith.constant 0 : i32
    return %c0_i32, %c0_i32_0 : i32, i32
  }
  func.func @transform_5(%arg0: i32) -> (i32, i32) {
    %c0_i32 = arith.constant 0 : i32
    %c0_i32_0 = arith.constant 0 : i32
    return %arg0, %c0_i32 : i32, i32
  }
}

</mosaic_0001>

<llo_original>
// kernel: tpu_custom_call.1
$region0: #{tpu_custom_call.1}
  #allocation0 [shape = 'u32[]', space=smem, size = 0x4, offset = 0x4, fixed_abs, tag = 'smem constant byte address 0x4 - core index']
  #allocation1 [shape = 'u32[144,128]{1,0:T(1,128)}', space=vmem, size = 0x12000, scoped, tag = 'internal scratch']
  %s0 = inlined_call_operand.vmem [shape: s32[208,4], index: 0, kind: input, shape index: {}]
  %s1 = inlined_call_operand.hbm [shape: bf16[512,128], index: 1, kind: input, shape index: {}]
  %s2 = inlined_call_operand.vmem [shape: f32[1,128], index: 2, kind: input, shape index: {}]
  %s3 = inlined_call_operand.vmem [shape: bf16[128,128], index: 3, kind: input, shape index: {}]
  %s4 = inlined_call_operand.vmem [shape: f32[1,128], index: 4, kind: input, shape index: {}]
  %s5 = inlined_call_operand.hbm [shape: f32[208,128], index: 5, kind: output, shape index: {}]
  %s6 = sld [smem:[#allocation0]]
  $region57: #{tpu_custom_call.1} parent=0
    _
  %s8 = ssub.s32 1, %s6
  %s9 = scalar_select 0, %s8, %s6
  $region1: #{tpu_custom_call.1} parent=0
    #allocation2 [shape = 'u8[131072]{0}', space=vmem, size = 0x20000, scoped, tag = 'input window, operand 1, single buffered']
    #allocation3 [shape = 's32[2]{0}', space=sflag, size = 0x8, scoped, tag = 'scoped memory for tpu_custom_call.1']
    #allocation4 [shape = 's32[2]{0}', space=sflag, size = 0x8, scoped, tag = 'scoped memory for tpu_custom_call.1']
    #allocation5 [shape = 'u8[106496]{0}', space=vmem, size = 0x1a000, scoped, tag = 'output window, operand 0']
    %10 = vsyncpa [#allocation3], 0
    %11 = vsyncpa [#allocation4], 0
    %s12 = scalar_lea.sflag [#allocation4], 1
    %13 = vsyncpa %s12, 0
    loop: start=0, step=1, limit=4
    $region2: #{tpu_custom_call.1} parent=1 // loop_pre_header
      _
    $region3: #{tpu_custom_call.1} parent=1 // loop_header
      %s15 = sphi 0, %s19
      %p16 = scmp.ge.s32.totalorder %s15, 4
      %s25 = sphi 0, %s27
      %s28 = sphi 0, %s25
      %s29 = sphi 0, %s28
      %s45 = sphi 0, %s29
      %s49 = sphi 0, %s49
      %s51 = sphi 0, %s49
      %s52 = sphi 0, %s51
      %s66 = sphi 0, %s52
      %s70 = sphi 0, %s70
      %s72 = sphi 0, %s70
      %s73 = sphi 0, %s72
      %s87 = sphi 0, %s73
      %s91 = sphi 0, %s91
      %s93 = sphi 0, %s91
      %s94 = sphi 0, %s93
      %s108 = sphi 0, %s94
      %s112 = sphi 0, %s112
      %s114 = sphi 0, %s112
      %s115 = sphi 0, %s114
      %s129 = sphi 0, %s115
      %s135 = sphi 0, %s137
      %s138 = sphi 0, %s135
      %s139 = sphi 0, %s138
      %s155 = sphi 0, %s139
    $region4: #{tpu_custom_call.1} parent=1 // loop_header_branch
      %18 = sbr.rel (%p16) target = $region8
    $region5: #{tpu_custom_call.1} parent=1 // loop_body
      %s20 = ssub.s32 %s15, 1
      %s21 = ssub.s32 %s15, 2
      %s22 = sadd.s32 %s15, 1
      %s23 = ssub.s32 %s15, %s22
      %p24 = scmp.eq.s32.totalorder %s23, 0
      %s26 = sadd.s32 %s25, 1
      %s27 = scalar_select %p24, %s25, %s26
      %p30 = pneg %p24
      %p31 = scmp.eq.s32.totalorder %s15, 1
      %p32 = por %p30, %p31
      %p33 = scmp.ne.s32.totalorder %s25, %s28
      %p34 = scmp.eq.s32.totalorder %s15, 0
      %p35 = por %p33, %p34
      %p36 = scmp.ne.s32.totalorder %s25, %s28
      %p37 = scmp.eq.s32.totalorder %s20, 1
      %p38 = por %p36, %p37
      %p39 = scmp.ne.s32.totalorder %s28, %s29
      %p40 = scmp.eq.s32.totalorder %s20, 0
      %p41 = por %p39, %p40
      %p42 = scmp.ne.s32.totalorder %s28, %s29
      %p43 = scmp.eq.s32.totalorder %s21, 1
      %p44 = por %p42, %p43
      %p46 = scmp.ne.s32.totalorder %s29, %s45
      %p47 = scmp.eq.s32.totalorder %s21, 0
      %p48 = por %p46, %p47
      %s50 = sadd.s32 %s49, 1
      %p53 = scmp.eq.s32.totalorder %s15, 1
      %p54 = scmp.ne.s32.totalorder %s49, %s51
      %p55 = scmp.eq.s32.totalorder %s15, 0
      %p56 = por %p54, %p55
      %p57 = scmp.ne.s32.totalorder %s49, %s51
      %p58 = scmp.eq.s32.totalorder %s20, 1
      %p59 = por %p57, %p58
      %p60 = scmp.ne.s32.totalorder %s51, %s52
      %p61 = scmp.eq.s32.totalorder %s20, 0
      %p62 = por %p60, %p61
      %p63 = scmp.ne.s32.totalorder %s51, %s52
      %p64 = scmp.eq.s32.totalorder %s21, 1
      %p65 = por %p63, %p64
      %p67 = scmp.ne.s32.totalorder %s52, %s66
      %p68 = scmp.eq.s32.totalorder %s21, 0
      %p69 = por %p67, %p68
      %s71 = sadd.s32 %s70, 1
      %p74 = scmp.eq.s32.totalorder %s15, 1
      %p75 = scmp.ne.s32.totalorder %s70, %s72
      %p76 = scmp.eq.s32.totalorder %s15, 0
      %p77 = por %p75, %p76
      %p78 = scmp.ne.s32.totalorder %s70, %s72
      %p79 = scmp.eq.s32.totalorder %s20, 1
      %p80 = por %p78, %p79
      %p81 = scmp.ne.s32.totalorder %s72, %s73
      %p82 = scmp.eq.s32.totalorder %s20, 0
      %p83 = por %p81, %p82
      %p84 = scmp.ne.s32.totalorder %s72, %s73
      %p85 = scmp.eq.s32.totalorder %s21, 1
      %p86 = por %p84, %p85
      %p88 = scmp.ne.s32.totalorder %s73, %s87
      %p89 = scmp.eq.s32.totalorder %s21, 0
      %p90 = por %p88, %p89
      %s92 = sadd.s32 %s91, 1
      %p95 = scmp.eq.s32.totalorder %s15, 1
      %p96 = scmp.ne.s32.totalorder %s91, %s93
      %p97 = scmp.eq.s32.totalorder %s15, 0
      %p98 = por %p96, %p97
      %p99 = scmp.ne.s32.totalorder %s91, %s93
      %p100 = scmp.eq.s32.totalorder %s20, 1
      %p101 = por %p99, %p100
      %p102 = scmp.ne.s32.totalorder %s93, %s94
      %p103 = scmp.eq.s32.totalorder %s20, 0
      %p104 = por %p102, %p103
      %p105 = scmp.ne.s32.totalorder %s93, %s94
      %p106 = scmp.eq.s32.totalorder %s21, 1
      %p107 = por %p105, %p106
      %p109 = scmp.ne.s32.totalorder %s94, %s108
      %p110 = scmp.eq.s32.totalorder %s21, 0
      %p111 = por %p109, %p110
      %s113 = sadd.s32 %s112, 1
      %p116 = scmp.eq.s32.totalorder %s15, 1
      %p117 = scmp.ne.s32.totalorder %s112, %s114
      %p118 = scmp.eq.s32.totalorder %s15, 0
      %p119 = por %p117, %p118
      %p120 = scmp.ne.s32.totalorder %s112, %s114
      %p121 = scmp.eq.s32.totalorder %s20, 1
      %p122 = por %p120, %p121
      %p123 = scmp.ne.s32.totalorder %s114, %s115
      %p124 = scmp.eq.s32.totalorder %s20, 0
      %p125 = por %p123, %p124
      %p126 = scmp.ne.s32.totalorder %s114, %s115
      %p127 = scmp.eq.s32.totalorder %s21, 1
      %p128 = por %p126, %p127
      %p130 = scmp.ne.s32.totalorder %s115, %s129
      %p131 = scmp.eq.s32.totalorder %s21, 0
      %p132 = por %p130, %p131
      %s133 = ssub.s32 %s15, %s22
      %p134 = scmp.eq.s32.totalorder %s133, 0
      %s136 = sadd.s32 %s135, 1
      %s137 = scalar_select %p134, %s135, %s136
      %p140 = pneg %p134
      %p141 = scmp.eq.s32.totalorder %s15, 1
      %p142 = por %p140, %p141
      %p143 = scmp.ne.s32.totalorder %s135, %s138
      %p144 = scmp.eq.s32.totalorder %s15, 0
      %p145 = por %p143, %p144
      %p146 = scmp.ne.s32.totalorder %s135, %s138
      %p147 = scmp.eq.s32.totalorder %s20, 1
      %p148 = por %p146, %p147
      %p149 = scmp.ne.s32.totalorder %s138, %s139
      %p150 = scmp.eq.s32.totalorder %s20, 0
      %p151 = por %p149, %p150
      %p152 = scmp.ne.s32.totalorder %s138, %s139
      %p153 = scmp.eq.s32.totalorder %s21, 1
      %p154 = por %p152, %p153
      %p156 = scmp.ne.s32.totalorder %s139, %s155
      %p157 = scmp.eq.s32.totalorder %s21, 0
      %p158 = por %p156, %p157
      %p159 = scmp.le.s32.totalorder 1, %s15
      %p160 = scmp.lt.s32.totalorder %s15, 3
      %p161 = pnand %p159, %p160
      %p162 = pneg %p161
      // Predicated region
      $region9: #{tpu_custom_call.1} parent=5 // pred_check
        _
      $region10: #{tpu_custom_call.1} parent=5 // pred_check_branch
        %164 = sbr.rel (%p161) target = $region12
      $region11: #{tpu_custom_call.1} parent=5 // pred_region
        %s165 = ssub.s32 %s15, 1
        // Predicated region
        $region13: #{tpu_custom_call.1} parent=11 // pred_check
          %p166 = pneg %p62
        $region14: #{tpu_custom_call.1} parent=11 // pred_check_branch
          %168 = sbr.rel (%p166) target = $region16
        $region15: #{tpu_custom_call.1} parent=11 // pred_region
          %s170 = ssub.s32 4096, 4096
          %171 = vsyncadd [#allocation3], %s170
          %s172 = sshll.u32 [#allocation2], 4
          %s173 = int_to_ptr.vmem [resolvable:$true] %s172
          %178 = dma.hbm_to_vmem [thread:$0]  %s1, 4096, %s173, [#allocation3], 64, 64, 4
        $region16: #{tpu_custom_call.1} parent=11 // pred_fallthru
          _
        // Predicated region
        $region17: #{tpu_custom_call.1} parent=11 // pred_check
          %p179 = pneg %p83
        $region18: #{tpu_custom_call.1} parent=11 // pred_check_branch
          %181 = sbr.rel (%p179) target = $region20
        $region19: #{tpu_custom_call.1} parent=11 // pred_region
          _
        $region20: #{tpu_custom_call.1} parent=11 // pred_fallthru
          _
        // Predicated region
        $region21: #{tpu_custom_call.1} parent=11 // pred_check
          %p182 = pneg %p104
        $region22: #{tpu_custom_call.1} parent=11 // pred_check_branch
          %184 = sbr.rel (%p182) target = $region24
        $region23: #{tpu_custom_call.1} parent=11 // pred_region
          _
        $region24: #{tpu_custom_call.1} parent=11 // pred_fallthru
          _
        // Predicated region
        $region25: #{tpu_custom_call.1} parent=11 // pred_check
          %p185 = pneg %p125
        $region26: #{tpu_custom_call.1} parent=11 // pred_check_branch
          %187 = sbr.rel (%p185) target = $region28
        $region27: #{tpu_custom_call.1} parent=11 // pred_region
          _
        $region28: #{tpu_custom_call.1} parent=11 // pred_fallthru
          _
      $region12: #{tpu_custom_call.1} parent=5 // pred_fallthru
        _
      %p188 = scmp.lt.s32.totalorder %s15, 2
      // Predicated region
      $region29: #{tpu_custom_call.1} parent=5 // pred_check
        %p189 = pneg %p188
      $region30: #{tpu_custom_call.1} parent=5 // pred_check_branch
        %191 = sbr.rel (%p189) target = $region32
      $region31: #{tpu_custom_call.1} parent=5 // pred_region
        // Predicated region
        $region33: #{tpu_custom_call.1} parent=31 // pred_check
          %p192 = pneg %p35
        $region34: #{tpu_custom_call.1} parent=31 // pred_check_branch
          %194 = sbr.rel (%p192) target = $region36
        $region35: #{tpu_custom_call.1} parent=31 // pred_region
          %s195 = smul.u32 13, %s15
          %p196 = scmp.lt.s32.totalorder %s195, 25
          %s197 = scalar_select %p196, %s195, 25
          %s198 = smul.addr %s197, 8
          %s199 = scalar_lea.vmem %s0, %s198
          %s200 = smul.u32 13, %s15
        $region36: #{tpu_custom_call.1} parent=31 // pred_fallthru
          _
      $region32: #{tpu_custom_call.1} parent=5 // pred_fallthru
        _
      %p201 = scmp.le.s32.totalorder 1, %s15
      %p202 = scmp.lt.s32.totalorder %s15, 3
      %p203 = pnand %p201, %p202
      %p204 = pneg %p203
      // Predicated region
      $region37: #{tpu_custom_call.1} parent=5 // pred_check
        _
      $region38: #{tpu_custom_call.1} parent=5 // pred_check_branch
        %206 = sbr.rel (%p203) target = $region40
      $region39: #{tpu_custom_call.1} parent=5 // pred_region
        %s207 = ssub.s32 %s15, 1
        // Predicated region
        $region41: #{tpu_custom_call.1} parent=39 // pred_check
          %p208 = pneg %p62
        $region42: #{tpu_custom_call.1} parent=39 // pred_check_branch
          %210 = sbr.rel (%p208) target = $region44
        $region43: #{tpu_custom_call.1} parent=39 // pred_region
          %211 = dma.done [#allocation3], 4096
        $region44: #{tpu_custom_call.1} parent=39 // pred_fallthru
          _
        %s212 = smul.u32 13, %s20
        %p213 = scmp.lt.s32.totalorder %s212, 25
        %s214 = scalar_select %p213, %s212, 25
        %s215 = smul.addr %s214, 8
        %s216 = scalar_lea.vmem %s0, %s215
        %p217 = pneg %p41
        %p218 = pneg %p38
        %p219 = pneg %p62
        %p220 = pneg %p59
        %p221 = pneg %p83
        %p222 = pneg %p80
        %p223 = pneg %p104
        %p224 = pneg %p101
        %p225 = pneg %p125
        %p226 = pneg %p122
        %p227 = pneg %p151
        %p228 = pneg %p148
        %s229 = sand.u32 %s138, 1
        %s230 = scalar_lea.sflag [#allocation4], %s229
        %s231 = sand.u32 %s138, 1
        %s232 = smul.addr %s231, 104
        %s233 = scalar_lea.vmem [#allocation5], %s232
        %s234 = smul.u32 13, %s20
        %p235 = scmp.lt.s32.totalorder %s234, 25
        %s236 = scalar_select %p235, %s234, 25
        %s237 = smul.addr %s236, 8
        %s238 = scalar_lea.vmem %s0, %s237
        %s239 = smul.u32 13, %s20
        %s240 = smul.u32 13, %s20
        %v242 = vld [vmem:[%s238] sm:$0xff]
        %v243 = vld [vmem:[%s238 + $0x8] sm:$0xff]
        %v244 = vld [vmem:[%s238 + $0x10] sm:$0xff]
        %v245 = vld [vmem:[%s238 + $0x18] sm:$0xff]
        %v246 = vld [vmem:[%s238 + $0x20] sm:$0xff]
        %v247 = vld [vmem:[%s238 + $0x28] sm:$0xff]
        %v248 = vld [vmem:[%s238 + $0x30] sm:$0xff]
        %v249 = vld [vmem:[%s238 + $0x38] sm:$0xff]
        %v250 = vld [vmem:[%s238 + $0x40] sm:$0xff]
        %v251 = vld [vmem:[%s238 + $0x48] sm:$0xff]
        %v252 = vld [vmem:[%s238 + $0x50] sm:$0xff]
        %v253 = vld [vmem:[%s238 + $0x58] sm:$0xff]
        %v254 = vld [vmem:[%s238 + $0x60] sm:$0xff]
        %v255 = vlaneseq
        %v256 = vand.u32 %v255, 127
        %v257 = vadd.s32 %v256, 128
        %v258 = vadd.s32 %v256, 256
        %v259 = vadd.s32 %v256, 384
        %260 = vset.pattern.permute.xlu0 0
        %261 = vperm.xlu0 %260, %v242
        %v262 = vpop.permute.xlu0 %261
        %263 = vset.pattern.permute.xlu0 0
        %264 = vperm.xlu0 %263, %v243
        %v265 = vpop.permute.xlu0 %264
        %266 = vset.pattern.permute.xlu0 0
        %267 = vperm.xlu0 %266, %v244
        %v268 = vpop.permute.xlu0 %267
        %269 = vset.pattern.permute.xlu0 0
        %270 = vperm.xlu0 %269, %v245
        %v271 = vpop.permute.xlu0 %270
        %272 = vset.pattern.permute.xlu0 0
        %273 = vperm.xlu0 %272, %v246
        %v274 = vpop.permute.xlu0 %273
        %275 = vset.pattern.permute.xlu0 0
        %276 = vperm.xlu0 %275, %v247
        %v277 = vpop.permute.xlu0 %276
        %278 = vset.pattern.permute.xlu0 0
        %279 = vperm.xlu0 %278, %v248
        %v280 = vpop.permute.xlu0 %279
        %281 = vset.pattern.permute.xlu0 0
        %282 = vperm.xlu0 %281, %v249
        %v283 = vpop.permute.xlu0 %282
        %284 = vset.pattern.permute.xlu0 0
        %285 = vperm.xlu0 %284, %v250
        %v286 = vpop.permute.xlu0 %285
        %287 = vset.pattern.permute.xlu0 0
        %288 = vperm.xlu0 %287, %v251
        %v289 = vpop.permute.xlu0 %288
        %290 = vset.pattern.permute.xlu0 0
        %291 = vperm.xlu0 %290, %v252
        %v292 = vpop.permute.xlu0 %291
        %293 = vset.pattern.permute.xlu0 0
        %294 = vperm.xlu0 %293, %v253
        %v295 = vpop.permute.xlu0 %294
        %296 = vset.pattern.permute.xlu0 0
        %297 = vperm.xlu0 %296, %v254
        %v298 = vpop.permute.xlu0 %297
        %vm299 = vcmp.eq.s32.totalorder %v256, %v262
        %vm300 = vcmp.eq.s32.totalorder %v257, %v262
        %vm301 = vcmp.eq.s32.totalorder %v258, %v262
        %vm302 = vcmp.eq.s32.totalorder %v259, %v262
        %vm303 = vcmp.eq.s32.totalorder %v256, %v265
        %vm304 = vcmp.eq.s32.totalorder %v257, %v265
        %vm305 = vcmp.eq.s32.totalorder %v258, %v265
        %vm306 = vcmp.eq.s32.totalorder %v259, %v265
        %vm307 = vcmp.eq.s32.totalorder %v256, %v268
        %vm308 = vcmp.eq.s32.totalorder %v257, %v268
        %vm309 = vcmp.eq.s32.totalorder %v258, %v268
        %vm310 = vcmp.eq.s32.totalorder %v259, %v268
        %vm311 = vcmp.eq.s32.totalorder %v256, %v271
        %vm312 = vcmp.eq.s32.totalorder %v257, %v271
        %vm313 = vcmp.eq.s32.totalorder %v258, %v271
        %vm314 = vcmp.eq.s32.totalorder %v259, %v271
        %vm315 = vcmp.eq.s32.totalorder %v256, %v274
        %vm316 = vcmp.eq.s32.totalorder %v257, %v274
        %vm317 = vcmp.eq.s32.totalorder %v258, %v274
        %vm318 = vcmp.eq.s32.totalorder %v259, %v274
        %vm319 = vcmp.eq.s32.totalorder %v256, %v277
        %vm320 = vcmp.eq.s32.totalorder %v257, %v277
        %vm321 = vcmp.eq.s32.totalorder %v258, %v277
        %vm322 = vcmp.eq.s32.totalorder %v259, %v277
        %vm323 = vcmp.eq.s32.totalorder %v256, %v280
        %vm324 = vcmp.eq.s32.totalorder %v257, %v280
        %vm325 = vcmp.eq.s32.totalorder %v258, %v280
        %vm326 = vcmp.eq.s32.totalorder %v259, %v280
        %vm327 = vcmp.eq.s32.totalorder %v256, %v283
        %vm328 = vcmp.eq.s32.totalorder %v257, %v283
        %vm329 = vcmp.eq.s32.totalorder %v258, %v283
        %vm330 = vcmp.eq.s32.totalorder %v259, %v283
        %vm331 = vcmp.eq.s32.totalorder %v256, %v286
        %vm332 = vcmp.eq.s32.totalorder %v257, %v286
        %vm333 = vcmp.eq.s32.totalorder %v258, %v286
        %vm334 = vcmp.eq.s32.totalorder %v259, %v286
        %vm335 = vcmp.eq.s32.totalorder %v256, %v289
        %vm336 = vcmp.eq.s32.totalorder %v257, %v289
        %vm337 = vcmp.eq.s32.totalorder %v258, %v289
        %vm338 = vcmp.eq.s32.totalorder %v259, %v289
        %vm339 = vcmp.eq.s32.totalorder %v256, %v292
        %vm340 = vcmp.eq.s32.totalorder %v257, %v292
        %vm341 = vcmp.eq.s32.totalorder %v258, %v292
        %vm342 = vcmp.eq.s32.totalorder %v259, %v292
        %vm343 = vcmp.eq.s32.totalorder %v256, %v295
        %vm344 = vcmp.eq.s32.totalorder %v257, %v295
        %vm345 = vcmp.eq.s32.totalorder %v258, %v295
        %vm346 = vcmp.eq.s32.totalorder %v259, %v295
        %vm347 = vcmp.eq.s32.totalorder %v256, %v298
        %vm348 = vcmp.eq.s32.totalorder %v257, %v298
        %vm349 = vcmp.eq.s32.totalorder %v258, %v298
        %vm350 = vcmp.eq.s32.totalorder %v259, %v298
        %v351 = vadd.s32 %v242, 128
        %v352 = vadd.s32 %v243, 128
        %v353 = vadd.s32 %v244, 128
        %v354 = vadd.s32 %v245, 128
        %v355 = vadd.s32 %v246, 128
        %v356 = vadd.s32 %v247, 128
        %v357 = vadd.s32 %v248, 128
        %v358 = vadd.s32 %v249, 128
        %v359 = vadd.s32 %v250, 128
        %v360 = vadd.s32 %v251, 128
        %v361 = vadd.s32 %v252, 128
        %v362 = vadd.s32 %v253, 128
        %v363 = vadd.s32 %v254, 128
        %364 = vset.pattern.permute.xlu0 1
        %365 = vperm.xlu0 %364, %v351
        %v366 = vpop.permute.xlu0 %365
        %367 = vset.pattern.permute.xlu0 1
        %368 = vperm.xlu0 %367, %v352
        %v369 = vpop.permute.xlu0 %368
        %370 = vset.pattern.permute.xlu0 1
        %371 = vperm.xlu0 %370, %v353
        %v372 = vpop.permute.xlu0 %371
        %373 = vset.pattern.permute.xlu0 1
        %374 = vperm.xlu0 %373, %v354
        %v375 = vpop.permute.xlu0 %374
        %376 = vset.pattern.permute.xlu0 1
        %377 = vperm.xlu0 %376, %v355
        %v378 = vpop.permute.xlu0 %377
        %379 = vset.pattern.permute.xlu0 1
        %380 = vperm.xlu0 %379, %v356
        %v381 = vpop.permute.xlu0 %380
        %382 = vset.pattern.permute.xlu0 1
        %383 = vperm.xlu0 %382, %v357
        %v384 = vpop.permute.xlu0 %383
        %385 = vset.pattern.permute.xlu0 1
        %386 = vperm.xlu0 %385, %v358
        %v387 = vpop.permute.xlu0 %386
        %388 = vset.pattern.permute.xlu0 1
        %389 = vperm.xlu0 %388, %v359
        %v390 = vpop.permute.xlu0 %389
        %391 = vset.pattern.permute.xlu0 1
        %392 = vperm.xlu0 %391, %v360
        %v393 = vpop.permute.xlu0 %392
        %394 = vset.pattern.permute.xlu0 1
        %395 = vperm.xlu0 %394, %v361
        %v396 = vpop.permute.xlu0 %395
        %397 = vset.pattern.permute.xlu0 1
        %398 = vperm.xlu0 %397, %v362
        %v399 = vpop.permute.xlu0 %398
        %400 = vset.pattern.permute.xlu0 1
        %401 = vperm.xlu0 %400, %v363
        %v402 = vpop.permute.xlu0 %401
        %vm403 = vcmp.eq.s32.totalorder %v256, %v366
        %vm404 = vcmp.eq.s32.totalorder %v257, %v366
        %vm405 = vcmp.eq.s32.totalorder %v258, %v366
        %vm406 = vcmp.eq.s32.totalorder %v259, %v366
        %vm407 = vcmp.eq.s32.totalorder %v256, %v369
        %vm408 = vcmp.eq.s32.totalorder %v257, %v369
        %vm409 = vcmp.eq.s32.totalorder %v258, %v369
        %vm410 = vcmp.eq.s32.totalorder %v259, %v369
        %vm411 = vcmp.eq.s32.totalorder %v256, %v372
        %vm412 = vcmp.eq.s32.totalorder %v257, %v372
        %vm413 = vcmp.eq.s32.totalorder %v258, %v372
        %vm414 = vcmp.eq.s32.totalorder %v259, %v372
        %vm415 = vcmp.eq.s32.totalorder %v256, %v375
        %vm416 = vcmp.eq.s32.totalorder %v257, %v375
        %vm417 = vcmp.eq.s32.totalorder %v258, %v375
        %vm418 = vcmp.eq.s32.totalorder %v259, %v375
        %vm419 = vcmp.eq.s32.totalorder %v256, %v378
        %vm420 = vcmp.eq.s32.totalorder %v257, %v378
        %vm421 = vcmp.eq.s32.totalorder %v258, %v378
        %vm422 = vcmp.eq.s32.totalorder %v259, %v378
        %vm423 = vcmp.eq.s32.totalorder %v256, %v381
        %vm424 = vcmp.eq.s32.totalorder %v257, %v381
        %vm425 = vcmp.eq.s32.totalorder %v258, %v381
        %vm426 = vcmp.eq.s32.totalorder %v259, %v381
        %vm427 = vcmp.eq.s32.totalorder %v256, %v384
        %vm428 = vcmp.eq.s32.totalorder %v257, %v384
        %vm429 = vcmp.eq.s32.totalorder %v258, %v384
        %vm430 = vcmp.eq.s32.totalorder %v259, %v384
        %vm431 = vcmp.eq.s32.totalorder %v256, %v387
        %vm432 = vcmp.eq.s32.totalorder %v257, %v387
        %vm433 = vcmp.eq.s32.totalorder %v258, %v387
        %vm434 = vcmp.eq.s32.totalorder %v259, %v387
        %vm435 = vcmp.eq.s32.totalorder %v256, %v390
        %vm436 = vcmp.eq.s32.totalorder %v257, %v390
        %vm437 = vcmp.eq.s32.totalorder %v258, %v390
        %vm438 = vcmp.eq.s32.totalorder %v259, %v390
        %vm439 = vcmp.eq.s32.totalorder %v256, %v393
        %vm440 = vcmp.eq.s32.totalorder %v257, %v393
        %vm441 = vcmp.eq.s32.totalorder %v258, %v393
        %vm442 = vcmp.eq.s32.totalorder %v259, %v393
        %vm443 = vcmp.eq.s32.totalorder %v256, %v396
        %vm444 = vcmp.eq.s32.totalorder %v257, %v396
        %vm445 = vcmp.eq.s32.totalorder %v258, %v396
        %vm446 = vcmp.eq.s32.totalorder %v259, %v396
        %vm447 = vcmp.eq.s32.totalorder %v256, %v399
        %vm448 = vcmp.eq.s32.totalorder %v257, %v399
        %vm449 = vcmp.eq.s32.totalorder %v258, %v399
        %vm450 = vcmp.eq.s32.totalorder %v259, %v399
        %vm451 = vcmp.eq.s32.totalorder %v256, %v402
        %vm452 = vcmp.eq.s32.totalorder %v257, %v402
        %vm453 = vcmp.eq.s32.totalorder %v258, %v402
        %vm454 = vcmp.eq.s32.totalorder %v259, %v402
        %vm455 = vmor %vm299, %vm403
        %vm456 = vmor %vm300, %vm404
        %vm457 = vmor %vm301, %vm405
        %vm458 = vmor %vm302, %vm406
        %vm459 = vmor %vm303, %vm407
        %vm460 = vmor %vm304, %vm408
        %vm461 = vmor %vm305, %vm409
        %vm462 = vmor %vm306, %vm410
        %vm463 = vmor %vm307, %vm411
        %vm464 = vmor %vm308, %vm412
        %vm465 = vmor %vm309, %vm413
        %vm466 = vmor %vm310, %vm414
        %vm467 = vmor %vm311, %vm415
        %vm468 = vmor %vm312, %vm416
        %vm469 = vmor %vm313, %vm417
        %vm470 = vmor %vm314, %vm418
        %vm471 = vmor %vm315, %vm419
        %vm472 = vmor %vm316, %vm420
        %vm473 = vmor %vm317, %vm421
        %vm474 = vmor %vm318, %vm422
        %vm475 = vmor %vm319, %vm423
        %vm476 = vmor %vm320, %vm424
        %vm477 = vmor %vm321, %vm425
        %vm478 = vmor %vm322, %vm426
        %vm479 = vmor %vm323, %vm427
        %vm480 = vmor %vm324, %vm428
        %vm481 = vmor %vm325, %vm429
        %vm482 = vmor %vm326, %vm430
        %vm483 = vmor %vm327, %vm431
        %vm484 = vmor %vm328, %vm432
        %vm485 = vmor %vm329, %vm433
        %vm486 = vmor %vm330, %vm434
        %vm487 = vmor %vm331, %vm435
        %vm488 = vmor %vm332, %vm436
        %vm489 = vmor %vm333, %vm437
        %vm490 = vmor %vm334, %vm438
        %vm491 = vmor %vm335, %vm439
        %vm492 = vmor %vm336, %vm440
        %vm493 = vmor %vm337, %vm441
        %vm494 = vmor %vm338, %vm442
        %vm495 = vmor %vm339, %vm443
        %vm496 = vmor %vm340, %vm444
        %vm497 = vmor %vm341, %vm445
        %vm498 = vmor %vm342, %vm446
        %vm499 = vmor %vm343, %vm447
        %vm500 = vmor %vm344, %vm448
        %vm501 = vmor %vm345, %vm449
        %vm502 = vmor %vm346, %vm450
        %vm503 = vmor %vm347, %vm451
        %vm504 = vmor %vm348, %vm452
        %vm505 = vmor %vm349, %vm453
        %vm506 = vmor %vm350, %vm454
        %v507 = vadd.s32 %v242, 256
        %v508 = vadd.s32 %v243, 256
        %v509 = vadd.s32 %v244, 256
        %v510 = vadd.s32 %v245, 256
        %v511 = vadd.s32 %v246, 256
        %v512 = vadd.s32 %v247, 256
        %v513 = vadd.s32 %v248, 256
        %v514 = vadd.s32 %v249, 256
        %v515 = vadd.s32 %v250, 256
        %v516 = vadd.s32 %v251, 256
        %v517 = vadd.s32 %v252, 256
        %v518 = vadd.s32 %v253, 256
        %v519 = vadd.s32 %v254, 256
        %520 = vset.pattern.permute.xlu0 2
        %521 = vperm.xlu0 %520, %v507
        %v522 = vpop.permute.xlu0 %521
        %523 = vset.pattern.permute.xlu0 2
        %524 = vperm.xlu0 %523, %v508
        %v525 = vpop.permute.xlu0 %524
        %526 = vset.pattern.permute.xlu0 2
        %527 = vperm.xlu0 %526, %v509
        %v528 = vpop.permute.xlu0 %527
        %529 = vset.pattern.permute.xlu0 2
        %530 = vperm.xlu0 %529, %v510
        %v531 = vpop.permute.xlu0 %530
        %532 = vset.pattern.permute.xlu0 2
        %533 = vperm.xlu0 %532, %v511
        %v534 = vpop.permute.xlu0 %533
        %535 = vset.pattern.permute.xlu0 2
        %536 = vperm.xlu0 %535, %v512
        %v537 = vpop.permute.xlu0 %536
        %538 = vset.pattern.permute.xlu0 2
        %539 = vperm.xlu0 %538, %v513
        %v540 = vpop.permute.xlu0 %539
        %541 = vset.pattern.permute.xlu0 2
        %542 = vperm.xlu0 %541, %v514
        %v543 = vpop.permute.xlu0 %542
        %544 = vset.pattern.permute.xlu0 2
        %545 = vperm.xlu0 %544, %v515
        %v546 = vpop.permute.xlu0 %545
        %547 = vset.pattern.permute.xlu0 2
        %548 = vperm.xlu0 %547, %v516
        %v549 = vpop.permute.xlu0 %548
        %550 = vset.pattern.permute.xlu0 2
        %551 = vperm.xlu0 %550, %v517
        %v552 = vpop.permute.xlu0 %551
        %553 = vset.pattern.permute.xlu0 2
        %554 = vperm.xlu0 %553, %v518
        %v555 = vpop.permute.xlu0 %554
        %556 = vset.pattern.permute.xlu0 2
        %557 = vperm.xlu0 %556, %v519
        %v558 = vpop.permute.xlu0 %557
        %vm559 = vcmp.eq.s32.totalorder %v256, %v522
        %vm560 = vcmp.eq.s32.totalorder %v257, %v522
        %vm561 = vcmp.eq.s32.totalorder %v258, %v522
        %vm562 = vcmp.eq.s32.totalorder %v259, %v522
        %vm563 = vcmp.eq.s32.totalorder %v256, %v525
        %vm564 = vcmp.eq.s32.totalorder %v257, %v525
        %vm565 = vcmp.eq.s32.totalorder %v258, %v525
        %vm566 = vcmp.eq.s32.totalorder %v259, %v525
        %vm567 = vcmp.eq.s32.totalorder %v256, %v528
        %vm568 = vcmp.eq.s32.totalorder %v257, %v528
        %vm569 = vcmp.eq.s32.totalorder %v258, %v528
        %vm570 = vcmp.eq.s32.totalorder %v259, %v528
        %vm571 = vcmp.eq.s32.totalorder %v256, %v531
        %vm572 = vcmp.eq.s32.totalorder %v257, %v531
        %vm573 = vcmp.eq.s32.totalorder %v258, %v531
        %vm574 = vcmp.eq.s32.totalorder %v259, %v531
        %vm575 = vcmp.eq.s32.totalorder %v256, %v534
        %vm576 = vcmp.eq.s32.totalorder %v257, %v534
        %vm577 = vcmp.eq.s32.totalorder %v258, %v534
        %vm578 = vcmp.eq.s32.totalorder %v259, %v534
        %vm579 = vcmp.eq.s32.totalorder %v256, %v537
        %vm580 = vcmp.eq.s32.totalorder %v257, %v537
        %vm581 = vcmp.eq.s32.totalorder %v258, %v537
        %vm582 = vcmp.eq.s32.totalorder %v259, %v537
        %vm583 = vcmp.eq.s32.totalorder %v256, %v540
        %vm584 = vcmp.eq.s32.totalorder %v257, %v540
        %vm585 = vcmp.eq.s32.totalorder %v258, %v540
        %vm586 = vcmp.eq.s32.totalorder %v259, %v540
        %vm587 = vcmp.eq.s32.totalorder %v256, %v543
        %vm588 = vcmp.eq.s32.totalorder %v257, %v543
        %vm589 = vcmp.eq.s32.totalorder %v258, %v543
        %vm590 = vcmp.eq.s32.totalorder %v259, %v543
        %vm591 = vcmp.eq.s32.totalorder %v256, %v546
        %vm592 = vcmp.eq.s32.totalorder %v257, %v546
        %vm593 = vcmp.eq.s32.totalorder %v258, %v546
        %vm594 = vcmp.eq.s32.totalorder %v259, %v546
        %vm595 = vcmp.eq.s32.totalorder %v256, %v549
        %vm596 = vcmp.eq.s32.totalorder %v257, %v549
        %vm597 = vcmp.eq.s32.totalorder %v258, %v549
        %vm598 = vcmp.eq.s32.totalorder %v259, %v549
        %vm599 = vcmp.eq.s32.totalorder %v256, %v552
        %vm600 = vcmp.eq.s32.totalorder %v257, %v552
        %vm601 = vcmp.eq.s32.totalorder %v258, %v552
        %vm602 = vcmp.eq.s32.totalorder %v259, %v552
        %vm603 = vcmp.eq.s32.totalorder %v256, %v555
        %vm604 = vcmp.eq.s32.totalorder %v257, %v555
        %vm605 = vcmp.eq.s32.totalorder %v258, %v555
        %vm606 = vcmp.eq.s32.totalorder %v259, %v555
        %vm607 = vcmp.eq.s32.totalorder %v256, %v558
        %vm608 = vcmp.eq.s32.totalorder %v257, %v558
        %vm609 = vcmp.eq.s32.totalorder %v258, %v558
        %vm610 = vcmp.eq.s32.totalorder %v259, %v558
        %vm611 = vmor %vm455, %vm559
        %vm612 = vmor %vm456, %vm560
        %vm613 = vmor %vm457, %vm561
        %vm614 = vmor %vm458, %vm562
        %vm615 = vmor %vm459, %vm563
        %vm616 = vmor %vm460, %vm564
        %vm617 = vmor %vm461, %vm565
        %vm618 = vmor %vm462, %vm566
        %vm619 = vmor %vm463, %vm567
        %vm620 = vmor %vm464, %vm568
        %vm621 = vmor %vm465, %vm569
        %vm622 = vmor %vm466, %vm570
        %vm623 = vmor %vm467, %vm571
        %vm624 = vmor %vm468, %vm572
        %vm625 = vmor %vm469, %vm573
        %vm626 = vmor %vm470, %vm574
        %vm627 = vmor %vm471, %vm575
        %vm628 = vmor %vm472, %vm576
        %vm629 = vmor %vm473, %vm577
        %vm630 = vmor %vm474, %vm578
        %vm631 = vmor %vm475, %vm579
        %vm632 = vmor %vm476, %vm580
        %vm633 = vmor %vm477, %vm581
        %vm634 = vmor %vm478, %vm582
        %vm635 = vmor %vm479, %vm583
        %vm636 = vmor %vm480, %vm584
        %vm637 = vmor %vm481, %vm585
        %vm638 = vmor %vm482, %vm586
        %vm639 = vmor %vm483, %vm587
        %vm640 = vmor %vm484, %vm588
        %vm641 = vmor %vm485, %vm589
        %vm642 = vmor %vm486, %vm590
        %vm643 = vmor %vm487, %vm591
        %vm644 = vmor %vm488, %vm592
        %vm645 = vmor %vm489, %vm593
        %vm646 = vmor %vm490, %vm594
        %vm647 = vmor %vm491, %vm595
        %vm648 = vmor %vm492, %vm596
        %vm649 = vmor %vm493, %vm597
        %vm650 = vmor %vm494, %vm598
        %vm651 = vmor %vm495, %vm599
        %vm652 = vmor %vm496, %vm600
        %vm653 = vmor %vm497, %vm601
        %vm654 = vmor %vm498, %vm602
        %vm655 = vmor %vm499, %vm603
        %vm656 = vmor %vm500, %vm604
        %vm657 = vmor %vm501, %vm605
        %vm658 = vmor %vm502, %vm606
        %vm659 = vmor %vm503, %vm607
        %vm660 = vmor %vm504, %vm608
        %vm661 = vmor %vm505, %vm609
        %vm662 = vmor %vm506, %vm610
        %v663 = vadd.s32 %v242, 384
        %v664 = vadd.s32 %v243, 384
        %v665 = vadd.s32 %v244, 384
        %v666 = vadd.s32 %v245, 384
        %v667 = vadd.s32 %v246, 384
        %v668 = vadd.s32 %v247, 384
        %v669 = vadd.s32 %v248, 384
        %v670 = vadd.s32 %v249, 384
        %v671 = vadd.s32 %v250, 384
        %v672 = vadd.s32 %v251, 384
        %v673 = vadd.s32 %v252, 384
        %v674 = vadd.s32 %v253, 384
        %v675 = vadd.s32 %v254, 384
        %676 = vset.pattern.permute.xlu0 3
        %677 = vperm.xlu0 %676, %v663
        %v678 = vpop.permute.xlu0 %677
        %679 = vset.pattern.permute.xlu0 3
        %680 = vperm.xlu0 %679, %v664
        %v681 = vpop.permute.xlu0 %680
        %682 = vset.pattern.permute.xlu0 3
        %683 = vperm.xlu0 %682, %v665
        %v684 = vpop.permute.xlu0 %683
        %685 = vset.pattern.permute.xlu0 3
        %686 = vperm.xlu0 %685, %v666
        %v687 = vpop.permute.xlu0 %686
        %688 = vset.pattern.permute.xlu0 3
        %689 = vperm.xlu0 %688, %v667
        %v690 = vpop.permute.xlu0 %689
        %691 = vset.pattern.permute.xlu0 3
        %692 = vperm.xlu0 %691, %v668
        %v693 = vpop.permute.xlu0 %692
        %694 = vset.pattern.permute.xlu0 3
        %695 = vperm.xlu0 %694, %v669
        %v696 = vpop.permute.xlu0 %695
        %697 = vset.pattern.permute.xlu0 3
        %698 = vperm.xlu0 %697, %v670
        %v699 = vpop.permute.xlu0 %698
        %700 = vset.pattern.permute.xlu0 3
        %701 = vperm.xlu0 %700, %v671
        %v702 = vpop.permute.xlu0 %701
        %703 = vset.pattern.permute.xlu0 3
        %704 = vperm.xlu0 %703, %v672
        %v705 = vpop.permute.xlu0 %704
        %706 = vset.pattern.permute.xlu0 3
        %707 = vperm.xlu0 %706, %v673
        %v708 = vpop.permute.xlu0 %707
        %709 = vset.pattern.permute.xlu0 3
        %710 = vperm.xlu0 %709, %v674
        %v711 = vpop.permute.xlu0 %710
        %712 = vset.pattern.permute.xlu0 3
        %713 = vperm.xlu0 %712, %v675
        %v714 = vpop.permute.xlu0 %713
        %vm715 = vcmp.eq.s32.totalorder %v256, %v678
        %vm716 = vcmp.eq.s32.totalorder %v257, %v678
        %vm717 = vcmp.eq.s32.totalorder %v258, %v678
        %vm718 = vcmp.eq.s32.totalorder %v259, %v678
        %vm719 = vcmp.eq.s32.totalorder %v256, %v681
        %vm720 = vcmp.eq.s32.totalorder %v257, %v681
        %vm721 = vcmp.eq.s32.totalorder %v258, %v681
        %vm722 = vcmp.eq.s32.totalorder %v259, %v681
        %vm723 = vcmp.eq.s32.totalorder %v256, %v684
        %vm724 = vcmp.eq.s32.totalorder %v257, %v684
        %vm725 = vcmp.eq.s32.totalorder %v258, %v684
        %vm726 = vcmp.eq.s32.totalorder %v259, %v684
        %vm727 = vcmp.eq.s32.totalorder %v256, %v687
        %vm728 = vcmp.eq.s32.totalorder %v257, %v687
        %vm729 = vcmp.eq.s32.totalorder %v258, %v687
        %vm730 = vcmp.eq.s32.totalorder %v259, %v687
        %vm731 = vcmp.eq.s32.totalorder %v256, %v690
        %vm732 = vcmp.eq.s32.totalorder %v257, %v690
        %vm733 = vcmp.eq.s32.totalorder %v258, %v690
        %vm734 = vcmp.eq.s32.totalorder %v259, %v690
        %vm735 = vcmp.eq.s32.totalorder %v256, %v693
        %vm736 = vcmp.eq.s32.totalorder %v257, %v693
        %vm737 = vcmp.eq.s32.totalorder %v258, %v693
        %vm738 = vcmp.eq.s32.totalorder %v259, %v693
        %vm739 = vcmp.eq.s32.totalorder %v256, %v696
        %vm740 = vcmp.eq.s32.totalorder %v257, %v696
        %vm741 = vcmp.eq.s32.totalorder %v258, %v696
        %vm742 = vcmp.eq.s32.totalorder %v259, %v696
        %vm743 = vcmp.eq.s32.totalorder %v256, %v699
        %vm744 = vcmp.eq.s32.totalorder %v257, %v699
        %vm745 = vcmp.eq.s32.totalorder %v258, %v699
        %vm746 = vcmp.eq.s32.totalorder %v259, %v699
        %vm747 = vcmp.eq.s32.totalorder %v256, %v702
        %vm748 = vcmp.eq.s32.totalorder %v257, %v702
        %vm749 = vcmp.eq.s32.totalorder %v258, %v702
        %vm750 = vcmp.eq.s32.totalorder %v259, %v702
        %vm751 = vcmp.eq.s32.totalorder %v256, %v705
        %vm752 = vcmp.eq.s32.totalorder %v257, %v705
        %vm753 = vcmp.eq.s32.totalorder %v258, %v705
        %vm754 = vcmp.eq.s32.totalorder %v259, %v705
        %vm755 = vcmp.eq.s32.totalorder %v256, %v708
        %vm756 = vcmp.eq.s32.totalorder %v257, %v708
        %vm757 = vcmp.eq.s32.totalorder %v258, %v708
        %vm758 = vcmp.eq.s32.totalorder %v259, %v708
        %vm759 = vcmp.eq.s32.totalorder %v256, %v711
        %vm760 = vcmp.eq.s32.totalorder %v257, %v711
        %vm761 = vcmp.eq.s32.totalorder %v258, %v711
        %vm762 = vcmp.eq.s32.totalorder %v259, %v711
        %vm763 = vcmp.eq.s32.totalorder %v256, %v714
        %vm764 = vcmp.eq.s32.totalorder %v257, %v714
        %vm765 = vcmp.eq.s32.totalorder %v258, %v714
        %vm766 = vcmp.eq.s32.totalorder %v259, %v714
        %vm767 = vmor %vm611, %vm715
        %vm768 = vmor %vm612, %vm716
        %vm769 = vmor %vm613, %vm717
        %vm770 = vmor %vm614, %vm718
        %vm771 = vmor %vm615, %vm719
        %vm772 = vmor %vm616, %vm720
        %vm773 = vmor %vm617, %vm721
        %vm774 = vmor %vm618, %vm722
        %vm775 = vmor %vm619, %vm723
        %vm776 = vmor %vm620, %vm724
        %vm777 = vmor %vm621, %vm725
        %vm778 = vmor %vm622, %vm726
        %vm779 = vmor %vm623, %vm727
        %vm780 = vmor %vm624, %vm728
        %vm781 = vmor %vm625, %vm729
        %vm782 = vmor %vm626, %vm730
        %vm783 = vmor %vm627, %vm731
        %vm784 = vmor %vm628, %vm732
        %vm785 = vmor %vm629, %vm733
        %vm786 = vmor %vm630, %vm734
        %vm787 = vmor %vm631, %vm735
        %vm788 = vmor %vm632, %vm736
        %vm789 = vmor %vm633, %vm737
        %vm790 = vmor %vm634, %vm738
        %vm791 = vmor %vm635, %vm739
        %vm792 = vmor %vm636, %vm740
        %vm793 = vmor %vm637, %vm741
        %vm794 = vmor %vm638, %vm742
        %vm795 = vmor %vm639, %vm743
        %vm796 = vmor %vm640, %vm744
        %vm797 = vmor %vm641, %vm745
        %vm798 = vmor %vm642, %vm746
        %vm799 = vmor %vm643, %vm747
        %vm800 = vmor %vm644, %vm748
        %vm801 = vmor %vm645, %vm749
        %vm802 = vmor %vm646, %vm750
        %vm803 = vmor %vm647, %vm751
        %vm804 = vmor %vm648, %vm752
        %vm805 = vmor %vm649, %vm753
        %vm806 = vmor %vm650, %vm754
        %vm807 = vmor %vm651, %vm755
        %vm808 = vmor %vm652, %vm756
        %vm809 = vmor %vm653, %vm757
        %vm810 = vmor %vm654, %vm758
        %vm811 = vmor %vm655, %vm759
        %vm812 = vmor %vm656, %vm760
        %vm813 = vmor %vm657, %vm761
        %vm814 = vmor %vm658, %vm762
        %vm815 = vmor %vm659, %vm763
        %vm816 = vmor %vm660, %vm764
        %vm817 = vmor %vm661, %vm765
        %vm818 = vmor %vm662, %vm766
        %v819 = vsel %vm767, 1, 0
        %v820 = vsel %vm768, 1, 0
        %v821 = vsel %vm769, 1, 0
        %v822 = vsel %vm770, 1, 0
        %v823 = vsel %vm771, 1, 0
        %v824 = vsel %vm772, 1, 0
        %v825 = vsel %vm773, 1, 0
        %v826 = vsel %vm774, 1, 0
        %v827 = vsel %vm775, 1, 0
        %v828 = vsel %vm776, 1, 0
        %v829 = vsel %vm777, 1, 0
        %v830 = vsel %vm778, 1, 0
        %v831 = vsel %vm779, 1, 0
        %v832 = vsel %vm780, 1, 0
        %v833 = vsel %vm781, 1, 0
        %v834 = vsel %vm782, 1, 0
        %v835 = vsel %vm783, 1, 0
        %v836 = vsel %vm784, 1, 0
        %v837 = vsel %vm785, 1, 0
        %v838 = vsel %vm786, 1, 0
        %v839 = vsel %vm787, 1, 0
        %v840 = vsel %vm788, 1, 0
        %v841 = vsel %vm789, 1, 0
        %v842 = vsel %vm790, 1, 0
        %v843 = vsel %vm791, 1, 0
        %v844 = vsel %vm792, 1, 0
        %v845 = vsel %vm793, 1, 0
        %v846 = vsel %vm794, 1, 0
        %v847 = vsel %vm795, 1, 0
        %v848 = vsel %vm796, 1, 0
        %v849 = vsel %vm797, 1, 0
        %v850 = vsel %vm798, 1, 0
        %v851 = vsel %vm799, 1, 0
        %v852 = vsel %vm800, 1, 0
        %v853 = vsel %vm801, 1, 0
        %v854 = vsel %vm802, 1, 0
        %v855 = vsel %vm803, 1, 0
        %v856 = vsel %vm804, 1, 0
        %v857 = vsel %vm805, 1, 0
        %v858 = vsel %vm806, 1, 0
        %v859 = vsel %vm807, 1, 0
        %v860 = vsel %vm808, 1, 0
        %v861 = vsel %vm809, 1, 0
        %v862 = vsel %vm810, 1, 0
        %v863 = vsel %vm811, 1, 0
        %v864 = vsel %vm812, 1, 0
        %v865 = vsel %vm813, 1, 0
        %v866 = vsel %vm814, 1, 0
        %v867 = vsel %vm815, 1, 0
        %v868 = vsel %vm816, 1, 0
        %v869 = vsel %vm817, 1, 0
        %v870 = vsel %vm818, 1, 0
        %v871 = vcvt.s32.f32 %v819
        %v872 = vcvt.s32.f32 %v820
        %v873 = vcvt.s32.f32 %v821
        %v874 = vcvt.s32.f32 %v822
        %v875 = vcvt.s32.f32 %v823
        %v876 = vcvt.s32.f32 %v824
        %v877 = vcvt.s32.f32 %v825
        %v878 = vcvt.s32.f32 %v826
        %v879 = vcvt.s32.f32 %v827
        %v880 = vcvt.s32.f32 %v828
        %v881 = vcvt.s32.f32 %v829
        %v882 = vcvt.s32.f32 %v830
        %v883 = vcvt.s32.f32 %v831
        %v884 = vcvt.s32.f32 %v832
        %v885 = vcvt.s32.f32 %v833
        %v886 = vcvt.s32.f32 %v834
        %v887 = vcvt.s32.f32 %v835
        %v888 = vcvt.s32.f32 %v836
        %v889 = vcvt.s32.f32 %v837
        %v890 = vcvt.s32.f32 %v838
        %v891 = vcvt.s32.f32 %v839
        %v892 = vcvt.s32.f32 %v840
        %v893 = vcvt.s32.f32 %v841
        %v894 = vcvt.s32.f32 %v842
        %v895 = vcvt.s32.f32 %v843
        %v896 = vcvt.s32.f32 %v844
        %v897 = vcvt.s32.f32 %v845
        %v898 = vcvt.s32.f32 %v846
        %v899 = vcvt.s32.f32 %v847
        %v900 = vcvt.s32.f32 %v848
        %v901 = vcvt.s32.f32 %v849
        %v902 = vcvt.s32.f32 %v850
        %v903 = vcvt.s32.f32 %v851
        %v904 = vcvt.s32.f32 %v852
        %v905 = vcvt.s32.f32 %v853
        %v906 = vcvt.s32.f32 %v854
        %v907 = vcvt.s32.f32 %v855
        %v908 = vcvt.s32.f32 %v856
        %v909 = vcvt.s32.f32 %v857
        %v910 = vcvt.s32.f32 %v858
        %v911 = vcvt.s32.f32 %v859
        %v912 = vcvt.s32.f32 %v860
        %v913 = vcvt.s32.f32 %v861
        %v914 = vcvt.s32.f32 %v862
        %v915 = vcvt.s32.f32 %v863
        %v916 = vcvt.s32.f32 %v864
        %v917 = vcvt.s32.f32 %v865
        %v918 = vcvt.s32.f32 %v866
        %v919 = vcvt.s32.f32 %v867
        %v920 = vcvt.s32.f32 %v868
        %v921 = vcvt.s32.f32 %v869
        %v922 = vcvt.s32.f32 %v870
        %v923 = vpack.c.bf16 %v875, %v871
        %v924 = vpack.c.bf16 %v876, %v872
        %v925 = vpack.c.bf16 %v877, %v873
        %v926 = vpack.c.bf16 %v878, %v874
        %v927 = vpack.c.bf16 %v883, %v879
        %v928 = vpack.c.bf16 %v884, %v880
        %v929 = vpack.c.bf16 %v885, %v881
        %v930 = vpack.c.bf16 %v886, %v882
        %v931 = vpack.c.bf16 %v891, %v887
        %v932 = vpack.c.bf16 %v892, %v888
        %v933 = vpack.c.bf16 %v893, %v889
        %v934 = vpack.c.bf16 %v894, %v890
        %v935 = vpack.c.bf16 %v899, %v895
        %v936 = vpack.c.bf16 %v900, %v896
        %v937 = vpack.c.bf16 %v901, %v897
        %v938 = vpack.c.bf16 %v902, %v898
        %v939 = vpack.c.bf16 %v907, %v903
        %v940 = vpack.c.bf16 %v908, %v904
        %v941 = vpack.c.bf16 %v909, %v905
        %v942 = vpack.c.bf16 %v910, %v906
        %v943 = vpack.c.bf16 %v915, %v911
        %v944 = vpack.c.bf16 %v916, %v912
        %v945 = vpack.c.bf16 %v917, %v913
        %v946 = vpack.c.bf16 %v918, %v914
        %v947 = vpack.c.bf16 %v919, %v919
        %v948 = vpack.c.bf16 %v920, %v920
        %v949 = vpack.c.bf16 %v921, %v921
        %v950 = vpack.c.bf16 %v922, %v922
        %v951 = vld [vmem:[#allocation2] sm:$0xf]
        %v952 = vld [vmem:[#allocation2 + $0x4] sm:$0xf]
        %v953 = vld [vmem:[#allocation2 + $0x8] sm:$0xf]
        %v954 = vld [vmem:[#allocation2 + $0xc] sm:$0xf]
        %v955 = vld [vmem:[#allocation2 + $0x10] sm:$0xf]
        %v956 = vld [vmem:[#allocation2 + $0x14] sm:$0xf]
        %v957 = vld [vmem:[#allocation2 + $0x18] sm:$0xf]
        %v958 = vld [vmem:[#allocation2 + $0x1c] sm:$0xf]
        %v959 = vld [vmem:[#allocation2 + $0x20] sm:$0xf]
        %v960 = vld [vmem:[#allocation2 + $0x24] sm:$0xf]
        %v961 = vld [vmem:[#allocation2 + $0x28] sm:$0xf]
        %v962 = vld [vmem:[#allocation2 + $0x2c] sm:$0xf]
        %v963 = vld [vmem:[#allocation2 + $0x30] sm:$0xf]
        %v964 = vld [vmem:[#allocation2 + $0x34] sm:$0xf]
        %v965 = vld [vmem:[#allocation2 + $0x38] sm:$0xf]
        %v966 = vld [vmem:[#allocation2 + $0x3c] sm:$0xf]
        %v967 = vld [vmem:[#allocation2 + $0x40] sm:$0xf]
        %v968 = vld [vmem:[#allocation2 + $0x44] sm:$0xf]
        %v969 = vld [vmem:[#allocation2 + $0x48] sm:$0xf]
        %v970 = vld [vmem:[#allocation2 + $0x4c] sm:$0xf]
        %v971 = vld [vmem:[#allocation2 + $0x50] sm:$0xf]
        %v972 = vld [vmem:[#allocation2 + $0x54] sm:$0xf]
        %v973 = vld [vmem:[#allocation2 + $0x58] sm:$0xf]
        %v974 = vld [vmem:[#allocation2 + $0x5c] sm:$0xf]
        %v975 = vld [vmem:[#allocation2 + $0x60] sm:$0xf]
        %v976 = vld [vmem:[#allocation2 + $0x64] sm:$0xf]
        %v977 = vld [vmem:[#allocation2 + $0x68] sm:$0xf]
        %v978 = vld [vmem:[#allocation2 + $0x6c] sm:$0xf]
        %v979 = vld [vmem:[#allocation2 + $0x70] sm:$0xf]
        %v980 = vld [vmem:[#allocation2 + $0x74] sm:$0xf]
        %v981 = vld [vmem:[#allocation2 + $0x78] sm:$0xf]
        %v982 = vld [vmem:[#allocation2 + $0x7c] sm:$0xf]
        %v983 = vld [vmem:[#allocation2 + $0x80] sm:$0xf]
        %v984 = vld [vmem:[#allocation2 + $0x84] sm:$0xf]
        %v985 = vld [vmem:[#allocation2 + $0x88] sm:$0xf]
        %v986 = vld [vmem:[#allocation2 + $0x8c] sm:$0xf]
        %v987 = vld [vmem:[#allocation2 + $0x90] sm:$0xf]
        %v988 = vld [vmem:[#allocation2 + $0x94] sm:$0xf]
        %v989 = vld [vmem:[#allocation2 + $0x98] sm:$0xf]
        %v990 = vld [vmem:[#allocation2 + $0x9c] sm:$0xf]
        %v991 = vld [vmem:[#allocation2 + $0xa0] sm:$0xf]
        %v992 = vld [vmem:[#allocation2 + $0xa4] sm:$0xf]
        %v993 = vld [vmem:[#allocation2 + $0xa8] sm:$0xf]
        %v994 = vld [vmem:[#allocation2 + $0xac] sm:$0xf]
        %v995 = vld [vmem:[#allocation2 + $0xb0] sm:$0xf]
        %v996 = vld [vmem:[#allocation2 + $0xb4] sm:$0xf]
        %v997 = vld [vmem:[#allocation2 + $0xb8] sm:$0xf]
        %v998 = vld [vmem:[#allocation2 + $0xbc] sm:$0xf]
        %v999 = vld [vmem:[#allocation2 + $0xc0] sm:$0xf]
        %v1000 = vld [vmem:[#allocation2 + $0xc4] sm:$0xf]
        %v1001 = vld [vmem:[#allocation2 + $0xc8] sm:$0xf]
        %v1002 = vld [vmem:[#allocation2 + $0xcc] sm:$0xf]
        %v1003 = vld [vmem:[#allocation2 + $0xd0] sm:$0xf]
        %v1004 = vld [vmem:[#allocation2 + $0xd4] sm:$0xf]
        %v1005 = vld [vmem:[#allocation2 + $0xd8] sm:$0xf]
        %v1006 = vld [vmem:[#allocation2 + $0xdc] sm:$0xf]
        %v1007 = vld [vmem:[#allocation2 + $0xe0] sm:$0xf]
        %v1008 = vld [vmem:[#allocation2 + $0xe4] sm:$0xf]
        %v1009 = vld [vmem:[#allocation2 + $0xe8] sm:$0xf]
        %v1010 = vld [vmem:[#allocation2 + $0xec] sm:$0xf]
        %v1011 = vld [vmem:[#allocation2 + $0xf0] sm:$0xf]
        %v1012 = vld [vmem:[#allocation2 + $0xf4] sm:$0xf]
        %v1013 = vld [vmem:[#allocation2 + $0xf8] sm:$0xf]
        %v1014 = vld [vmem:[#allocation2 + $0xfc] sm:$0xf]
        %v1015 = vld [vmem:[%s2] sm:$0x1]
        %v1017 = vlaneseq
        %v1018 = vshrl.u32 %v1017, 7
        %v1019 = vsub.s32 0, %v1018
        %v1020 = vrot.slane %v1015, %v1019
        %v1086 = vunpack.c.l.b16 %v951
        %v1087 = vunpack.c.l.b16 %v952
        %v1088 = vunpack.c.l.b16 %v953
        %v1089 = vunpack.c.l.b16 %v954
        %v1090 = vunpack.c.l.b16 %v955
        %v1091 = vunpack.c.l.b16 %v956
        %v1092 = vunpack.c.l.b16 %v957
        %v1093 = vunpack.c.l.b16 %v958
        %v1094 = vunpack.c.l.b16 %v959
        %v1095 = vunpack.c.l.b16 %v960
        %v1096 = vunpack.c.l.b16 %v961
        %v1097 = vunpack.c.l.b16 %v962
        %v1098 = vunpack.c.l.b16 %v963
        %v1099 = vunpack.c.l.b16 %v964
        %v1100 = vunpack.c.l.b16 %v965
        %v1101 = vunpack.c.l.b16 %v966
        %v1102 = vunpack.c.l.b16 %v967
        %v1103 = vunpack.c.l.b16 %v968
        %v1104 = vunpack.c.l.b16 %v969
        %v1105 = vunpack.c.l.b16 %v970
        %v1106 = vunpack.c.l.b16 %v971
        %v1107 = vunpack.c.l.b16 %v972
        %v1108 = vunpack.c.l.b16 %v973
        %v1109 = vunpack.c.l.b16 %v974
        %v1110 = vunpack.c.l.b16 %v975
        %v1111 = vunpack.c.l.b16 %v976
        %v1112 = vunpack.c.l.b16 %v977
        %v1113 = vunpack.c.l.b16 %v978
        %v1114 = vunpack.c.l.b16 %v979
        %v1115 = vunpack.c.l.b16 %v980
        %v1116 = vunpack.c.l.b16 %v981
        %v1117 = vunpack.c.l.b16 %v982
        %v1118 = vunpack.c.l.b16 %v983
        %v1119 = vunpack.c.l.b16 %v984
        %v1120 = vunpack.c.l.b16 %v985
        %v1121 = vunpack.c.l.b16 %v986
        %v1122 = vunpack.c.l.b16 %v987
        %v1123 = vunpack.c.l.b16 %v988
        %v1124 = vunpack.c.l.b16 %v989
        %v1125 = vunpack.c.l.b16 %v990
        %v1126 = vunpack.c.l.b16 %v991
        %v1127 = vunpack.c.l.b16 %v992
        %v1128 = vunpack.c.l.b16 %v993
        %v1129 = vunpack.c.l.b16 %v994
        %v1130 = vunpack.c.l.b16 %v995
        %v1131 = vunpack.c.l.b16 %v996
        %v1132 = vunpack.c.l.b16 %v997
        %v1133 = vunpack.c.l.b16 %v998
        %v1134 = vunpack.c.l.b16 %v999
        %v1135 = vunpack.c.l.b16 %v1000
        %v1136 = vunpack.c.l.b16 %v1001
        %v1137 = vunpack.c.l.b16 %v1002
        %v1138 = vunpack.c.l.b16 %v1003
        %v1139 = vunpack.c.l.b16 %v1004
        %v1140 = vunpack.c.l.b16 %v1005
        %v1141 = vunpack.c.l.b16 %v1006
        %v1142 = vunpack.c.l.b16 %v1007
        %v1143 = vunpack.c.l.b16 %v1008
        %v1144 = vunpack.c.l.b16 %v1009
        %v1145 = vunpack.c.l.b16 %v1010
        %v1146 = vunpack.c.l.b16 %v1011
        %v1147 = vunpack.c.l.b16 %v1012
        %v1148 = vunpack.c.l.b16 %v1013
        %v1149 = vunpack.c.l.b16 %v1014
        %v1150 = vpack.c.b16 %v1087, %v1086
        %v1151 = vpack.c.b16 %v1089, %v1088
        %v1152 = vpack.c.b16 %v1091, %v1090
        %v1153 = vpack.c.b16 %v1093, %v1092
        %v1154 = vpack.c.b16 %v1095, %v1094
        %v1155 = vpack.c.b16 %v1097, %v1096
        %v1156 = vpack.c.b16 %v1099, %v1098
        %v1157 = vpack.c.b16 %v1101, %v1100
        %v1158 = vpack.c.b16 %v1103, %v1102
        %v1159 = vpack.c.b16 %v1105, %v1104
        %v1160 = vpack.c.b16 %v1107, %v1106
        %v1161 = vpack.c.b16 %v1109, %v1108
        %v1162 = vpack.c.b16 %v1111, %v1110
        %v1163 = vpack.c.b16 %v1113, %v1112
        %v1164 = vpack.c.b16 %v1115, %v1114
        %v1165 = vpack.c.b16 %v1117, %v1116
        %v1166 = vpack.c.b16 %v1119, %v1118
        %v1167 = vpack.c.b16 %v1121, %v1120
        %v1168 = vpack.c.b16 %v1123, %v1122
        %v1169 = vpack.c.b16 %v1125, %v1124
        %v1170 = vpack.c.b16 %v1127, %v1126
        %v1171 = vpack.c.b16 %v1129, %v1128
        %v1172 = vpack.c.b16 %v1131, %v1130
        %v1173 = vpack.c.b16 %v1133, %v1132
        %v1174 = vpack.c.b16 %v1135, %v1134
        %v1175 = vpack.c.b16 %v1137, %v1136
        %v1176 = vpack.c.b16 %v1139, %v1138
        %v1177 = vpack.c.b16 %v1141, %v1140
        %v1178 = vpack.c.b16 %v1143, %v1142
        %v1179 = vpack.c.b16 %v1145, %v1144
        %v1180 = vpack.c.b16 %v1147, %v1146
        %v1181 = vpack.c.b16 %v1149, %v1148
        %1214 = vmatprep.subr.bf16.mxu0 0
        %1215 = vmatpush1.bf16.msra.mxu0 %v1150
        %1216 = vmatprep.subr.bf16.mxu0 0
        %1217 = vmatpush1.bf16.msra.mxu0 %v1151
        %1218 = vmatprep.subr.bf16.mxu0 0
        %1219 = vmatpush1.bf16.msra.mxu0 %v1152
        %1220 = vmatprep.subr.bf16.mxu0 0
        %1221 = vmatpush1.bf16.msra.mxu0 %v1153
        %1222 = vmatprep.subr.bf16.mxu0 0
        %1223 = vmatpush1.bf16.msra.mxu0 %v1154
        %1224 = vmatprep.subr.bf16.mxu0 0
        %1225 = vmatpush1.bf16.msra.mxu0 %v1155
        %1226 = vmatprep.subr.bf16.mxu0 0
        %1227 = vmatpush1.bf16.msra.mxu0 %v1156
        %1228 = vmatprep.subr.bf16.mxu0 0
        %1229 = vmatpush1.bf16.msra.mxu0 %v1157
        %1230 = vmatprep.subr.bf16.mxu0 0
        %1231 = vmatpush1.bf16.msra.mxu0 %v1158
        %1232 = vmatprep.subr.bf16.mxu0 0
        %1233 = vmatpush1.bf16.msra.mxu0 %v1159
        %1234 = vmatprep.subr.bf16.mxu0 0
        %1235 = vmatpush1.bf16.msra.mxu0 %v1160
        %1236 = vmatprep.subr.bf16.mxu0 0
        %1237 = vmatpush1.bf16.msra.mxu0 %v1161
        %1238 = vmatprep.subr.bf16.mxu0 0
        %1239 = vmatpush1.bf16.msra.mxu0 %v1162
        %1240 = vmatprep.subr.bf16.mxu0 0
        %1241 = vmatpush1.bf16.msra.mxu0 %v1163
        %1242 = vmatprep.subr.bf16.mxu0 0
        %1243 = vmatpush1.bf16.msra.mxu0 %v1164
        %1244 = vmatprep.subr.bf16.mxu0 0
        %1245 = vmatpush1.bf16.msra.mxu0 %v1165
        %1246 = vmatprep.mubr.bf16.mxu0 %v924
        %1247 = vmatmul.mubr.bf16.gmra.mrb[0].mxu0 %v923
        %v1248 = vpop.f32.mrb[0].mxu0
        %v1249 = vadd.f32 %v1020, %v1248
        %v1250 = vpop.f32.mrb[0].mxu0
        %v1251 = vpop.f32.mrb[0].mxu0
        %v1252 = vadd.f32 %v1020, %v1251
        %v1253 = vpop.f32.mrb[0].mxu0
        %1254 = vmatprep.mubr.bf16.mxu0 %v928
        %1255 = vmatmul.mubr.bf16.gmra.mrb[0].mxu0 %v927
        %v1256 = vpop.f32.mrb[0].mxu0
        %v1257 = vadd.f32 %v1020, %v1256
        %v1258 = vpop.f32.mrb[0].mxu0
        %v1259 = vpop.f32.mrb[0].mxu0
        %v1260 = vadd.f32 %v1020, %v1259
        %v1261 = vpop.f32.mrb[0].mxu0
        %1262 = vmatprep.mubr.bf16.mxu0 %v932
        %1263 = vmatmul.mubr.bf16.gmra.mrb[0].mxu0 %v931
        %v1264 = vpop.f32.mrb[0].mxu0
        %v1265 = vadd.f32 %v1020, %v1264
        %v1266 = vpop.f32.mrb[0].mxu0
        %v1267 = vpop.f32.mrb[0].mxu0
        %v1268 = vadd.f32 %v1020, %v1267
        %v1269 = vpop.f32.mrb[0].mxu0
        %1270 = vmatprep.mubr.bf16.mxu0 %v936
        %1271 = vmatmul.mubr.bf16.gmra.mrb[0].mxu0 %v935
        %v1272 = vpop.f32.mrb[0].mxu0
        %v1273 = vadd.f32 %v1020, %v1272
        %v1274 = vpop.f32.mrb[0].mxu0
        %v1275 = vpop.f32.mrb[0].mxu0
        %v1276 = vadd.f32 %v1020, %v1275
        %v1277 = vpop.f32.mrb[0].mxu0
        %1278 = vmatprep.mubr.bf16.mxu0 %v940
        %1279 = vmatmul.mubr.bf16.gmra.mrb[0].mxu0 %v939
        %v1280 = vpop.f32.mrb[0].mxu0
        %v1281 = vadd.f32 %v1020, %v1280
        %v1282 = vpop.f32.mrb[0].mxu0
        %v1283 = vpop.f32.mrb[0].mxu0
        %v1284 = vadd.f32 %v1020, %v1283
        %v1285 = vpop.f32.mrb[0].mxu0
        %1286 = vmatprep.mubr.bf16.mxu0 %v944
        %1287 = vmatmul.mubr.bf16.gmra.mrb[0].mxu0 %v943
        %v1288 = vpop.f32.mrb[0].mxu0
        %v1289 = vadd.f32 %v1020, %v1288
        %v1290 = vpop.f32.mrb[0].mxu0
        %v1291 = vpop.f32.mrb[0].mxu0
        %v1292 = vadd.f32 %v1020, %v1291
        %v1293 = vpop.f32.mrb[0].mxu0
        %1294 = vmatprep.mubr.bf16.mxu0 %v948
        %1295 = vmatmul.mubr.bf16.gmra.mrb[0].mxu0 %v947
        %v1296 = vpop.f32.mrb[0].mxu0
        %v1297 = vadd.f32 %v1020, %v1296
        %v1298 = vpop.f32.mrb[0].mxu0
        %v1299 = vpop.f32.mrb[0].mxu0
        %v1300 = vpop.f32.mrb[0].mxu0
        %1301 = vdwg.mxu0
        %1302 = vmatprep.subr.bf16.mxu0 0
        %1303 = vmatpush1.bf16.msra.mxu0 %v1166
        %1304 = vmatprep.subr.bf16.mxu0 0
        %1305 = vmatpush1.bf16.msra.mxu0 %v1167
        %1306 = vmatprep.subr.bf16.mxu0 0
        %1307 = vmatpush1.bf16.msra.mxu0 %v1168
        %1308 = vmatprep.subr.bf16.mxu0 0
        %1309 = vmatpush1.bf16.msra.mxu0 %v1169
        %1310 = vmatprep.subr.bf16.mxu0 0
        %1311 = vmatpush1.bf16.msra.mxu0 %v1170
        %1312 = vmatprep.subr.bf16.mxu0 0
        %1313 = vmatpush1.bf16.msra.mxu0 %v1171
        %1314 = vmatprep.subr.bf16.mxu0 0
        %1315 = vmatpush1.bf16.msra.mxu0 %v1172
        %1316 = vmatprep.subr.bf16.mxu0 0
        %1317 = vmatpush1.bf16.msra.mxu0 %v1173
        %1318 = vmatprep.subr.bf16.mxu0 0
        %1319 = vmatpush1.bf16.msra.mxu0 %v1174
        %1320 = vmatprep.subr.bf16.mxu0 0
        %1321 = vmatpush1.bf16.msra.mxu0 %v1175
        %1322 = vmatprep.subr.bf16.mxu0 0
        %1323 = vmatpush1.bf16.msra.mxu0 %v1176
        %1324 = vmatprep.subr.bf16.mxu0 0
        %1325 = vmatpush1.bf16.msra.mxu0 %v1177
        %1326 = vmatprep.subr.bf16.mxu0 0
        %1327 = vmatpush1.bf16.msra.mxu0 %v1178
        %1328 = vmatprep.subr.bf16.mxu0 0
        %1329 = vmatpush1.bf16.msra.mxu0 %v1179
        %1330 = vmatprep.subr.bf16.mxu0 0
        %1331 = vmatpush1.bf16.msra.mxu0 %v1180
        %1332 = vmatprep.subr.bf16.mxu0 0
        %1333 = vmatpush1.bf16.msra.mxu0 %v1181
        %1334 = vmatprep.mubr.bf16.mxu0 %v926
        %1335 = vmatmul.mubr.bf16.gmra.mrb[0].mxu0 %v925
        %v1336 = vpop.f32.mrb[0].mxu0
        %v1337 = vadd.f32 %v1249, %v1336
        %v1338 = vpop.f32.mrb[0].mxu0
        %v1339 = vpop.f32.mrb[0].mxu0
        %v1340 = vadd.f32 %v1252, %v1339
        %v1341 = vpop.f32.mrb[0].mxu0
        %1342 = vmatprep.mubr.bf16.mxu0 %v930
        %1343 = vmatmul.mubr.bf16.gmra.mrb[0].mxu0 %v929
        %v1344 = vpop.f32.mrb[0].mxu0
        %v1345 = vadd.f32 %v1257, %v1344
        %v1346 = vpop.f32.mrb[0].mxu0
        %v1347 = vpop.f32.mrb[0].mxu0
        %v1348 = vadd.f32 %v1260, %v1347
        %v1349 = vpop.f32.mrb[0].mxu0
        %1350 = vmatprep.mubr.bf16.mxu0 %v934
        %1351 = vmatmul.mubr.bf16.gmra.mrb[0].mxu0 %v933
        %v1352 = vpop.f32.mrb[0].mxu0
        %v1353 = vadd.f32 %v1265, %v1352
        %v1354 = vpop.f32.mrb[0].mxu0
        %v1355 = vpop.f32.mrb[0].mxu0
        %v1356 = vadd.f32 %v1268, %v1355
        %v1357 = vpop.f32.mrb[0].mxu0
        %1358 = vmatprep.mubr.bf16.mxu0 %v938
        %1359 = vmatmul.mubr.bf16.gmra.mrb[0].mxu0 %v937
        %v1360 = vpop.f32.mrb[0].mxu0
        %v1361 = vadd.f32 %v1273, %v1360
        %v1362 = vpop.f32.mrb[0].mxu0
        %v1363 = vpop.f32.mrb[0].mxu0
        %v1364 = vadd.f32 %v1276, %v1363
        %v1365 = vpop.f32.mrb[0].mxu0
        %1366 = vmatprep.mubr.bf16.mxu0 %v942
        %1367 = vmatmul.mubr.bf16.gmra.mrb[0].mxu0 %v941
        %v1368 = vpop.f32.mrb[0].mxu0
        %v1369 = vadd.f32 %v1281, %v1368
        %v1370 = vpop.f32.mrb[0].mxu0
        %v1371 = vpop.f32.mrb[0].mxu0
        %v1372 = vadd.f32 %v1284, %v1371
        %v1373 = vpop.f32.mrb[0].mxu0
        %1374 = vmatprep.mubr.bf16.mxu0 %v946
        %1375 = vmatmul.mubr.bf16.gmra.mrb[0].mxu0 %v945
        %v1376 = vpop.f32.mrb[0].mxu0
        %v1377 = vadd.f32 %v1289, %v1376
        %v1378 = vpop.f32.mrb[0].mxu0
        %v1379 = vpop.f32.mrb[0].mxu0
        %v1380 = vadd.f32 %v1292, %v1379
        %v1381 = vpop.f32.mrb[0].mxu0
        %1382 = vmatprep.mubr.bf16.mxu0 %v950
        %1383 = vmatmul.mubr.bf16.gmra.mrb[0].mxu0 %v949
        %v1384 = vpop.f32.mrb[0].mxu0
        %v1385 = vadd.f32 %v1297, %v1384
        %v1386 = vpop.f32.mrb[0].mxu0
        %v1387 = vpop.f32.mrb[0].mxu0
        %v1388 = vpop.f32.mrb[0].mxu0
        %1389 = vdwg.mxu0
        %v1390 = vmax.f32 %v1337, 0.0
        %v1391 = vmax.f32 %v1340, 0.0
        %v1392 = vmax.f32 %v1345, 0.0
        %v1393 = vmax.f32 %v1348, 0.0
        %v1394 = vmax.f32 %v1353, 0.0
        %v1395 = vmax.f32 %v1356, 0.0
        %v1396 = vmax.f32 %v1361, 0.0
        %v1397 = vmax.f32 %v1364, 0.0
        %v1398 = vmax.f32 %v1369, 0.0
        %v1399 = vmax.f32 %v1372, 0.0
        %v1400 = vmax.f32 %v1377, 0.0
        %v1401 = vmax.f32 %v1380, 0.0
        %v1402 = vmax.f32 %v1385, 0.0
        %v1403 = vpack.c.bf16 %v1391, %v1390
        %v1404 = vpack.c.bf16 %v1393, %v1392
        %v1405 = vpack.c.bf16 %v1395, %v1394
        %v1406 = vpack.c.bf16 %v1397, %v1396
        %v1407 = vpack.c.bf16 %v1399, %v1398
        %v1408 = vpack.c.bf16 %v1401, %v1400
        %v1409 = vpack.c.bf16 %v1402, %v1402
        %v1410 = vld [vmem:[%s3] sm:$0xf]
        %v1411 = vld [vmem:[%s3 + $0x4] sm:$0xf]
        %v1412 = vld [vmem:[%s3 + $0x8] sm:$0xf]
        %v1413 = vld [vmem:[%s3 + $0xc] sm:$0xf]
        %v1414 = vld [vmem:[%s3 + $0x10] sm:$0xf]
        %v1415 = vld [vmem:[%s3 + $0x14] sm:$0xf]
        %v1416 = vld [vmem:[%s3 + $0x18] sm:$0xf]
        %v1417 = vld [vmem:[%s3 + $0x1c] sm:$0xf]
        %v1418 = vld [vmem:[%s3 + $0x20] sm:$0xf]
        %v1419 = vld [vmem:[%s3 + $0x24] sm:$0xf]
        %v1420 = vld [vmem:[%s3 + $0x28] sm:$0xf]
        %v1421 = vld [vmem:[%s3 + $0x2c] sm:$0xf]
        %v1422 = vld [vmem:[%s3 + $0x30] sm:$0xf]
        %v1423 = vld [vmem:[%s3 + $0x34] sm:$0xf]
        %v1424 = vld [vmem:[%s3 + $0x38] sm:$0xf]
        %v1425 = vld [vmem:[%s3 + $0x3c] sm:$0xf]
        %v1426 = vld [vmem:[%s4] sm:$0x1]
        %v1428 = vlaneseq
        %v1429 = vshrl.u32 %v1428, 7
        %v1430 = vsub.s32 0, %v1429
        %v1431 = vrot.slane %v1426, %v1430
        %v1449 = vunpack.c.l.b16 %v1410
        %v1450 = vunpack.c.l.b16 %v1411
        %v1451 = vunpack.c.l.b16 %v1412
        %v1452 = vunpack.c.l.b16 %v1413
        %v1453 = vunpack.c.l.b16 %v1414
        %v1454 = vunpack.c.l.b16 %v1415
        %v1455 = vunpack.c.l.b16 %v1416
        %v1456 = vunpack.c.l.b16 %v1417
        %v1457 = vunpack.c.l.b16 %v1418
        %v1458 = vunpack.c.l.b16 %v1419
        %v1459 = vunpack.c.l.b16 %v1420
        %v1460 = vunpack.c.l.b16 %v1421
        %v1461 = vunpack.c.l.b16 %v1422
        %v1462 = vunpack.c.l.b16 %v1423
        %v1463 = vunpack.c.l.b16 %v1424
        %v1464 = vunpack.c.l.b16 %v1425
        %v1465 = vpack.c.b16 %v1450, %v1449
        %v1466 = vpack.c.b16 %v1452, %v1451
        %v1467 = vpack.c.b16 %v1454, %v1453
        %v1468 = vpack.c.b16 %v1456, %v1455
        %v1469 = vpack.c.b16 %v1458, %v1457
        %v1470 = vpack.c.b16 %v1460, %v1459
        %v1471 = vpack.c.b16 %v1462, %v1461
        %v1472 = vpack.c.b16 %v1464, %v1463
        %1481 = vmatprep.subr.bf16.mxu0 0
        %1482 = vmatpush1.bf16.msra.mxu0 %v1465
        %1483 = vmatprep.subr.bf16.mxu0 0
        %1484 = vmatpush1.bf16.msra.mxu0 %v1466
        %1485 = vmatprep.subr.bf16.mxu0 0
        %1486 = vmatpush1.bf16.msra.mxu0 %v1467
        %1487 = vmatprep.subr.bf16.mxu0 0
        %1488 = vmatpush1.bf16.msra.mxu0 %v1468
        %1489 = vmatprep.subr.bf16.mxu0 0
        %1490 = vmatpush1.bf16.msra.mxu0 %v1469
        %1491 = vmatprep.subr.bf16.mxu0 0
        %1492 = vmatpush1.bf16.msra.mxu0 %v1470
        %1493 = vmatprep.subr.bf16.mxu0 0
        %1494 = vmatpush1.bf16.msra.mxu0 %v1471
        %1495 = vmatprep.subr.bf16.mxu0 0
        %1496 = vmatpush1.bf16.msra.mxu0 %v1472
        %1497 = vmatprep.subr.bf16.mxu0 0
        %1498 = vmatpush1.bf16.msra.mxu0 0
        %1499 = vmatprep.subr.bf16.mxu0 0
        %1500 = vmatpush1.bf16.msra.mxu0 0
        %1501 = vmatprep.subr.bf16.mxu0 0
        %1502 = vmatpush1.bf16.msra.mxu0 0
        %1503 = vmatprep.subr.bf16.mxu0 0
        %1504 = vmatpush1.bf16.msra.mxu0 0
        %1505 = vmatprep.subr.bf16.mxu0 0
        %1506 = vmatpush1.bf16.msra.mxu0 0
        %1507 = vmatprep.subr.bf16.mxu0 0
        %1508 = vmatpush1.bf16.msra.mxu0 0
        %1509 = vmatprep.subr.bf16.mxu0 0
        %1510 = vmatpush1.bf16.msra.mxu0 0
        %1511 = vmatprep.subr.bf16.mxu0 0
        %1512 = vmatpush1.bf16.msra.mxu0 0
        %1513 = vmatprep.mubr.bf16.mxu0 0
        %1514 = vmatmul.mubr.bf16.gmra.mrb[0].mxu0 %v1403
        %v1515 = vpop.f32.mrb[0].mxu0
        %v1516 = vadd.f32 %v1431, %v1515
        %v1517 = vpop.f32.mrb[0].mxu0
        %v1518 = vpop.f32.mrb[0].mxu0
        %v1519 = vadd.f32 %v1431, %v1518
        %v1520 = vpop.f32.mrb[0].mxu0
        %1521 = vmatprep.mubr.bf16.mxu0 0
        %1522 = vmatmul.mubr.bf16.gmra.mrb[0].mxu0 %v1404
        %v1523 = vpop.f32.mrb[0].mxu0
        %v1524 = vadd.f32 %v1431, %v1523
        %v1525 = vpop.f32.mrb[0].mxu0
        %v1526 = vpop.f32.mrb[0].mxu0
        %v1527 = vadd.f32 %v1431, %v1526
        %v1528 = vpop.f32.mrb[0].mxu0
        %1529 = vmatprep.mubr.bf16.mxu0 0
        %1530 = vmatmul.mubr.bf16.gmra.mrb[0].mxu0 %v1405
        %v1531 = vpop.f32.mrb[0].mxu0
        %v1532 = vadd.f32 %v1431, %v1531
        %v1533 = vpop.f32.mrb[0].mxu0
        %v1534 = vpop.f32.mrb[0].mxu0
        %v1535 = vadd.f32 %v1431, %v1534
        %v1536 = vpop.f32.mrb[0].mxu0
        %1537 = vmatprep.mubr.bf16.mxu0 0
        %1538 = vmatmul.mubr.bf16.gmra.mrb[0].mxu0 %v1406
        %v1539 = vpop.f32.mrb[0].mxu0
        %v1540 = vadd.f32 %v1431, %v1539
        %v1541 = vpop.f32.mrb[0].mxu0
        %v1542 = vpop.f32.mrb[0].mxu0
        %v1543 = vadd.f32 %v1431, %v1542
        %v1544 = vpop.f32.mrb[0].mxu0
        %1545 = vmatprep.mubr.bf16.mxu0 0
        %1546 = vmatmul.mubr.bf16.gmra.mrb[0].mxu0 %v1407
        %v1547 = vpop.f32.mrb[0].mxu0
        %v1548 = vadd.f32 %v1431, %v1547
        %v1549 = vpop.f32.mrb[0].mxu0
        %v1550 = vpop.f32.mrb[0].mxu0
        %v1551 = vadd.f32 %v1431, %v1550
        %v1552 = vpop.f32.mrb[0].mxu0
        %1553 = vmatprep.mubr.bf16.mxu0 0
        %1554 = vmatmul.mubr.bf16.gmra.mrb[0].mxu0 %v1408
        %v1555 = vpop.f32.mrb[0].mxu0
        %v1556 = vadd.f32 %v1431, %v1555
        %v1557 = vpop.f32.mrb[0].mxu0
        %v1558 = vpop.f32.mrb[0].mxu0
        %v1559 = vadd.f32 %v1431, %v1558
        %v1560 = vpop.f32.mrb[0].mxu0
        %1561 = vmatprep.mubr.bf16.mxu0 0
        %1562 = vmatmul.mubr.bf16.gmra.mrb[0].mxu0 %v1409
        %v1563 = vpop.f32.mrb[0].mxu0
        %v1564 = vadd.f32 %v1431, %v1563
        %v1565 = vpop.f32.mrb[0].mxu0
        %v1566 = vpop.f32.mrb[0].mxu0
        %v1567 = vpop.f32.mrb[0].mxu0
        %1568 = vdwg.mxu0
        %1569 = vmax.xlane.f32.xlu0 %v1516
        %v1570 = vpop.xlane.xlu0 %1569
        %1571 = vmax.xlane.f32.xlu0 %v1519
        %v1572 = vpop.xlane.xlu0 %1571
        %1573 = vmax.xlane.f32.xlu0 %v1524
        %v1574 = vpop.xlane.xlu0 %1573
        %1575 = vmax.xlane.f32.xlu0 %v1527
        %v1576 = vpop.xlane.xlu0 %1575
        %1577 = vmax.xlane.f32.xlu0 %v1532
        %v1578 = vpop.xlane.xlu0 %1577
        %1579 = vmax.xlane.f32.xlu0 %v1535
        %v1580 = vpop.xlane.xlu0 %1579
        %1581 = vmax.xlane.f32.xlu0 %v1540
        %v1582 = vpop.xlane.xlu0 %1581
        %1583 = vmax.xlane.f32.xlu0 %v1543
        %v1584 = vpop.xlane.xlu0 %1583
        %1585 = vmax.xlane.f32.xlu0 %v1548
        %v1586 = vpop.xlane.xlu0 %1585
        %1587 = vmax.xlane.f32.xlu0 %v1551
        %v1588 = vpop.xlane.xlu0 %1587
        %1589 = vmax.xlane.f32.xlu0 %v1556
        %v1590 = vpop.xlane.xlu0 %1589
        %1591 = vmax.xlane.f32.xlu0 %v1559
        %v1592 = vpop.xlane.xlu0 %1591
        %1593 = vmax.xlane.f32.xlu0 %v1564
        %v1594 = vpop.xlane.xlu0 %1593
        %v1595 = vsub.f32 %v1516, %v1570
        %v1596 = vsub.f32 %v1519, %v1572
        %v1597 = vsub.f32 %v1524, %v1574
        %v1598 = vsub.f32 %v1527, %v1576
        %v1599 = vsub.f32 %v1532, %v1578
        %v1600 = vsub.f32 %v1535, %v1580
        %v1601 = vsub.f32 %v1540, %v1582
        %v1602 = vsub.f32 %v1543, %v1584
        %v1603 = vsub.f32 %v1548, %v1586
        %v1604 = vsub.f32 %v1551, %v1588
        %v1605 = vsub.f32 %v1556, %v1590
        %v1606 = vsub.f32 %v1559, %v1592
        %v1607 = vsub.f32 %v1564, %v1594
        %v1608 = vmul.f32 %v1595, 1.442695
        %v1609 = vpow.pop %v1608
        %v1610 = vmul.f32 %v1596, 1.442695
        %v1611 = vpow.pop %v1610
        %v1612 = vmul.f32 %v1597, 1.442695
        %v1613 = vpow.pop %v1612
        %v1614 = vmul.f32 %v1598, 1.442695
        %v1615 = vpow.pop %v1614
        %v1616 = vmul.f32 %v1599, 1.442695
        %v1617 = vpow.pop %v1616
        %v1618 = vmul.f32 %v1600, 1.442695
        %v1619 = vpow.pop %v1618
        %v1620 = vmul.f32 %v1601, 1.442695
        %v1621 = vpow.pop %v1620
        %v1622 = vmul.f32 %v1602, 1.442695
        %v1623 = vpow.pop %v1622
        %v1624 = vmul.f32 %v1603, 1.442695
        %v1625 = vpow.pop %v1624
        %v1626 = vmul.f32 %v1604, 1.442695
        %v1627 = vpow.pop %v1626
        %v1628 = vmul.f32 %v1605, 1.442695
        %v1629 = vpow.pop %v1628
        %v1630 = vmul.f32 %v1606, 1.442695
        %v1631 = vpow.pop %v1630
        %v1632 = vmul.f32 %v1607, 1.442695
        %v1633 = vpow.pop %v1632
        %1634 = vadd.xlane.f32.xlu0 %v1609
        %v1635 = vpop.xlane.xlu0 %1634
        %1636 = vadd.xlane.f32.xlu0 %v1611
        %v1637 = vpop.xlane.xlu0 %1636
        %1638 = vadd.xlane.f32.xlu0 %v1613
        %v1639 = vpop.xlane.xlu0 %1638
        %1640 = vadd.xlane.f32.xlu0 %v1615
        %v1641 = vpop.xlane.xlu0 %1640
        %1642 = vadd.xlane.f32.xlu0 %v1617
        %v1643 = vpop.xlane.xlu0 %1642
        %1644 = vadd.xlane.f32.xlu0 %v1619
        %v1645 = vpop.xlane.xlu0 %1644
        %1646 = vadd.xlane.f32.xlu0 %v1621
        %v1647 = vpop.xlane.xlu0 %1646
        %1648 = vadd.xlane.f32.xlu0 %v1623
        %v1649 = vpop.xlane.xlu0 %1648
        %1650 = vadd.xlane.f32.xlu0 %v1625
        %v1651 = vpop.xlane.xlu0 %1650
        %1652 = vadd.xlane.f32.xlu0 %v1627
        %v1653 = vpop.xlane.xlu0 %1652
        %1654 = vadd.xlane.f32.xlu0 %v1629
        %v1655 = vpop.xlane.xlu0 %1654
        %1656 = vadd.xlane.f32.xlu0 %v1631
        %v1657 = vpop.xlane.xlu0 %1656
        %1658 = vadd.xlane.f32.xlu0 %v1633
        %v1659 = vpop.xlane.xlu0 %1658
        %v1660 = vlog2.pop %v1635
        %v1661 = vmul.f32 %v1660, 0.6931472
        %v1662 = vlog2.pop %v1637
        %v1663 = vmul.f32 %v1662, 0.6931472
        %v1664 = vlog2.pop %v1639
        %v1665 = vmul.f32 %v1664, 0.6931472
        %v1666 = vlog2.pop %v1641
        %v1667 = vmul.f32 %v1666, 0.6931472
        %v1668 = vlog2.pop %v1643
        %v1669 = vmul.f32 %v1668, 0.6931472
        %v1670 = vlog2.pop %v1645
        %v1671 = vmul.f32 %v1670, 0.6931472
        %v1672 = vlog2.pop %v1647
        %v1673 = vmul.f32 %v1672, 0.6931472
        %v1674 = vlog2.pop %v1649
        %v1675 = vmul.f32 %v1674, 0.6931472
        %v1676 = vlog2.pop %v1651
        %v1677 = vmul.f32 %v1676, 0.6931472
        %v1678 = vlog2.pop %v1653
        %v1679 = vmul.f32 %v1678, 0.6931472
        %v1680 = vlog2.pop %v1655
        %v1681 = vmul.f32 %v1680, 0.6931472
        %v1682 = vlog2.pop %v1657
        %v1683 = vmul.f32 %v1682, 0.6931472
        %v1684 = vlog2.pop %v1659
        %v1685 = vmul.f32 %v1684, 0.6931472
        %v1686 = vsub.f32 %v1595, %v1661
        %v1687 = vsub.f32 %v1596, %v1663
        %v1688 = vsub.f32 %v1597, %v1665
        %v1689 = vsub.f32 %v1598, %v1667
        %v1690 = vsub.f32 %v1599, %v1669
        %v1691 = vsub.f32 %v1600, %v1671
        %v1692 = vsub.f32 %v1601, %v1673
        %v1693 = vsub.f32 %v1602, %v1675
        %v1694 = vsub.f32 %v1603, %v1677
        %v1695 = vsub.f32 %v1604, %v1679
        %v1696 = vsub.f32 %v1605, %v1681
        %v1697 = vsub.f32 %v1606, %v1683
        %v1698 = vsub.f32 %v1607, %v1685
        %1699 = vst [vmem:[%s233] sm:$0xff] %v1686
        %1700 = vst [vmem:[%s233 + $0x8] sm:$0xff] %v1687
        %1701 = vst [vmem:[%s233 + $0x10] sm:$0xff] %v1688
        %1702 = vst [vmem:[%s233 + $0x18] sm:$0xff] %v1689
        %1703 = vst [vmem:[%s233 + $0x20] sm:$0xff] %v1690
        %1704 = vst [vmem:[%s233 + $0x28] sm:$0xff] %v1691
        %1705 = vst [vmem:[%s233 + $0x30] sm:$0xff] %v1692
        %1706 = vst [vmem:[%s233 + $0x38] sm:$0xff] %v1693
        %1707 = vst [vmem:[%s233 + $0x40] sm:$0xff] %v1694
        %1708 = vst [vmem:[%s233 + $0x48] sm:$0xff] %v1695
        %1709 = vst [vmem:[%s233 + $0x50] sm:$0xff] %v1696
        %1710 = vst [vmem:[%s233 + $0x58] sm:$0xff] %v1697
        %1711 = vst [vmem:[%s233 + $0x60] sm:$0xff] %v1698
        %s1712 = sand.u32 %s138, 1
        %s1713 = scalar_lea.sflag [#allocation4], %s1712
        %s1714 = sand.u32 %s138, 1
        %s1715 = smul.addr %s1714, 104
        %s1716 = scalar_lea.vmem [#allocation5], %s1715
        // Predicated region
        $region45: #{tpu_custom_call.1} parent=39 // pred_check
          %p1717 = pneg %p148
        $region46: #{tpu_custom_call.1} parent=39 // pred_check_branch
          %1719 = sbr.rel (%p1717) target = $region48
        $region47: #{tpu_custom_call.1} parent=39 // pred_region
          %s1720 = smul.u32 13, %s20
          %s1722 = ssub.s32 1664, 1664
          %1723 = vsyncadd %s1713, %s1722
          %s1724 = smul.addr %s1720, 128
          %s1725 = scalar_lea.hbm %s5, %s1724
          %s1726 = sshll.u32 %s1716, 4
          %s1727 = int_to_ptr.vmem [resolvable:$true] %s1726
          %1732 = dma.vmem_to_hbm [thread:$0]  %s1727, 1664, %s1725, %s1713, 128, 128, 8
        $region48: #{tpu_custom_call.1} parent=39 // pred_fallthru
          _
      $region40: #{tpu_custom_call.1} parent=5 // pred_fallthru
        _
      %p1733 = scmp.le.s32.totalorder 2, %s15
      // Predicated region
      $region49: #{tpu_custom_call.1} parent=5 // pred_check
        %p1734 = pneg %p1733
      $region50: #{tpu_custom_call.1} parent=5 // pred_check_branch
        %1736 = sbr.rel (%p1734) target = $region52
      $region51: #{tpu_custom_call.1} parent=5 // pred_region
        %s1737 = ssub.s32 %s15, 2
        // Predicated region
        $region53: #{tpu_custom_call.1} parent=51 // pred_check
          %p1738 = pneg %p154
        $region54: #{tpu_custom_call.1} parent=51 // pred_check_branch
          %1740 = sbr.rel (%p1738) target = $region56
        $region55: #{tpu_custom_call.1} parent=51 // pred_region
          %s1741 = sand.u32 %s139, 1
          %s1742 = scalar_lea.sflag [#allocation4], %s1741
          %s1743 = sand.u32 %s139, 1
          %s1744 = smul.addr %s1743, 104
          %s1745 = scalar_lea.vmem [#allocation5], %s1744
          %1746 = dma.done %s1742, 1664
        $region56: #{tpu_custom_call.1} parent=51 // pred_fallthru
          _
      $region52: #{tpu_custom_call.1} parent=5 // pred_fallthru
        _
    $region6: #{tpu_custom_call.1} parent=1 // loop_footer
      %s19 = sadd.s32 1, %s15
    $region7: #{tpu_custom_call.1} parent=1 // loop_footer_branch
      %14 = sbr.rel target = $region3
    $region8: #{tpu_custom_call.1} parent=1 // loop_exit
      _
    %1747 = vsyncpa [#allocation3], 1
    %s1748 = scalar_lea.sflag [#allocation3], 1
    %1749 = vsyncpa %s1748, 1
    %1750 = vsyncpa [#allocation4], 1
    %s1751 = scalar_lea.sflag [#allocation4], 1
    %1752 = vsyncpa %s1751, 1

</llo_original>
